<compile_context>
chip_gen: v7x
topology: tpu7x:2x2x1
jax: 0.10.0
libtpu: 0.0.40
codegen_flags: <defaults>
</compile_context>

<pallas_src>
import math

import jax
import jax.numpy as jnp
from jax.experimental import pallas as pl
from jax.experimental.pallas import tpu as pltpu

# ---------------- config (small synthetic ChatGLM-like config) ----------------
SEQ = 8
IN_FEATURES = 32          # in_features of IdentityMappingModule
HIDDEN = 32               # hidden_features == configuration.hidden_size
NUM_HEADS = 4             # configuration.num_attention_heads
HEAD_DIM = HIDDEN // NUM_HEADS
FFN = 4 * HIDDEN          # ChatGLM inner_hidden_size = 4 * hidden_size
NUM_LAYERS = 2            # configuration.num_layers (for the alpha residual scale)
LN_EPS = 1e-5             # configuration.layernorm_epsilon
BN_EPS = 1e-5             # nn.BatchNorm1d default eps
ALPHA = math.sqrt(2.0 * NUM_LAYERS)

# rows of the packed parameter slab `vecs` ([N_VEC_ROWS, 128], lane-padded)
R_ZL1_B, R_ZL1_G, R_ZL1_BE = 0, 1, 2
R_LN1_G, R_LN1_B = 3, 4
R_B_QKV = 5
R_B_O = 6
R_LN2_G, R_LN2_B = 7, 8
R_B_H4H = 9
R_B_4HH = 10
R_ZL2_B, R_ZL2_G, R_ZL2_BE = 11, 12, 13
N_VEC_ROWS = 16


# ---------------- in-kernel helpers (operate on values, stay in vregs) --------
def _layernorm(x, gamma, beta):
    mean = jnp.mean(x, axis=-1, keepdims=True)
    var = jnp.mean((x - mean) ** 2, axis=-1, keepdims=True)
    return (x - mean) * jax.lax.rsqrt(var + LN_EPS) * gamma + beta


def _batchnorm_rows(y, gamma, beta):
    # BatchNorm1d in training mode: batch statistics over the row (seq) axis.
    mean = jnp.mean(y, axis=0, keepdims=True)
    var = jnp.mean((y - mean) ** 2, axis=0, keepdims=True)   # biased variance
    return gamma * (y - mean) * jax.lax.rsqrt(var + BN_EPS) + beta


# ---------------- the single fused kernel --------------------------------------
def _identity_mapping_kernel(x_ref, vec_ref, zl1w_ref, wqkv_ref, wo_ref,
                             wh4h_ref, w4hh_ref, zl2w_ref, o_ref):
    x = x_ref[...]                                   # [S, Fin]
    vec = vec_ref[...]                               # [16, 128] packed small params

    zl1_b  = vec[R_ZL1_B:R_ZL1_B + 1, :HIDDEN]
    zl1_g  = vec[R_ZL1_G:R_ZL1_G + 1, :HIDDEN]
    zl1_be = vec[R_ZL1_BE:R_ZL1_BE + 1, :HIDDEN]
    ln1_g  = vec[R_LN1_G:R_LN1_G + 1, :HIDDEN]
    ln1_b  = vec[R_LN1_B:R_LN1_B + 1, :HIDDEN]
    b_qkv  = vec[R_B_QKV:R_B_QKV + 1, :3 * HIDDEN]
    b_o    = vec[R_B_O:R_B_O + 1, :HIDDEN]
    ln2_g  = vec[R_LN2_G:R_LN2_G + 1, :HIDDEN]
    ln2_b  = vec[R_LN2_B:R_LN2_B + 1, :HIDDEN]
    b_h4h  = vec[R_B_H4H:R_B_H4H + 1, :FFN]
    b_4hh  = vec[R_B_4HH:R_B_4HH + 1, :HIDDEN]
    zl2_b  = vec[R_ZL2_B:R_ZL2_B + 1, :IN_FEATURES]
    zl2_g  = vec[R_ZL2_G:R_ZL2_G + 1, :IN_FEATURES]
    zl2_be = vec[R_ZL2_BE:R_ZL2_BE + 1, :IN_FEATURES]

    zl1_w = zl1w_ref[...]                            # [Fin, HID]   (zero-init in module)
    w_qkv = wqkv_ref[...]                            # [HID, 3*HID]
    w_o   = wo_ref[...]                              # [HID, HID]
    w_h4h = wh4h_ref[...]                            # [HID, FFN]
    w_4hh = w4hh_ref[...]                            # [FFN, HID]
    zl2_w = zl2w_ref[...]                            # [HID, Fin]   (zero-init in module)

    # ---- ZeroLinearBatchNorm 1 ----
    # NOTE: weight is 0 at module init, so this dot is pure overhead for this
    # configuration; kept so the kernel is correct for arbitrary (trained) weights.
    y1 = jnp.dot(x, zl1_w, preferred_element_type=jnp.float32) + zl1_b
    h = _batchnorm_rows(y1, zl1_g, zl1_be)           # [S, HID]

    # ---- GLMBlock ----
    attn_input = _layernorm(h, ln1_g, ln1_b)         # [S, HID]
    qkv = jnp.dot(attn_input, w_qkv, preferred_element_type=jnp.float32) + b_qkv  # [S, 3*HID]

    # causal mask built in-kernel from iota (no HBM mask input)
    rows = jax.lax.broadcasted_iota(jnp.int32, (SEQ, SEQ), 0)
    cols = jax.lax.broadcasted_iota(jnp.int32, (SEQ, SEQ), 1)
    neg_mask = jnp.where(cols <= rows, jnp.float32(0.0), jnp.float32(-1e9))

    scale = jnp.float32(1.0 / math.sqrt(HEAD_DIM))
    attn_acc = jnp.zeros((SEQ, HIDDEN), jnp.float32)
    for hd in range(NUM_HEADS):                      # unrolled: 4 heads, lane slices
        q_h = qkv[:, hd * HEAD_DIM:(hd + 1) * HEAD_DIM]
        k_h = qkv[:, HIDDEN + hd * HEAD_DIM:HIDDEN + (hd + 1) * HEAD_DIM]
        v_h = qkv[:, 2 * HIDDEN + hd * HEAD_DIM:2 * HIDDEN + (hd + 1) * HEAD_DIM]
        s = jax.lax.dot_general(q_h, k_h, (((1,), (1,)), ((), ())),
                                preferred_element_type=jnp.float32) * scale + neg_mask
        s = s - jnp.max(s, axis=-1, keepdims=True)
        p = jnp.exp(s)
        p = p * pl.reciprocal(jnp.sum(p, axis=-1, keepdims=True), approx=True)
        ctx_h = jnp.dot(p, v_h, preferred_element_type=jnp.float32)     # [S, Dh]
        # fold per-head context straight into the output projection (no concat)
        attn_acc = attn_acc + jnp.dot(ctx_h, w_o[hd * HEAD_DIM:(hd + 1) * HEAD_DIM, :],
                                      preferred_element_type=jnp.float32)
    attn_out = attn_acc + b_o                        # [S, HID]

    h2 = attn_input * ALPHA + attn_out               # ChatGLM alpha-residual
    mlp_input = _layernorm(h2, ln2_g, ln2_b)
    h4 = jnp.dot(mlp_input, w_h4h, preferred_element_type=jnp.float32) + b_h4h
    h4 = jax.nn.gelu(h4, approximate=True)           # ChatGLM tanh-approx GELU
    mlp_out = jnp.dot(h4, w_4hh, preferred_element_type=jnp.float32) + b_4hh
    glm_out = mlp_input * ALPHA + mlp_out            # [S, HID]

    # ---- ZeroLinearBatchNorm 2 ----  (weight also zero-init; same note as above)
    y2 = jnp.dot(glm_out, zl2_w, preferred_element_type=jnp.float32) + zl2_b
    out = _batchnorm_rows(y2, zl2_g, zl2_be)         # [S, Fin]

    # final residual with the original input, done in-kernel
    o_ref[...] = out + x


# ---------------- parameters (deterministic, per __init__ shapes) --------------
def init_params(key):
    ks = jax.random.split(key, 8)

    def small(k, n):
        return (jax.random.normal(k, (n,)) * 0.02).astype(jnp.float32)

    # Packed small-vector slab: one row per bias / LN / BN vector, lane-padded
    # to 128 -> a single VMEM input instead of ~14 tiny padded DMAs.
    rows = [
        small(ks[0], HIDDEN),                   # 0  zl1 linear bias
        jnp.ones((HIDDEN,), jnp.float32),       # 1  zl1 BN gamma
        jnp.zeros((HIDDEN,), jnp.float32),      # 2  zl1 BN beta
        jnp.ones((HIDDEN,), jnp.float32),       # 3  ln1 gamma
        jnp.zeros((HIDDEN,), jnp.float32),      # 4  ln1 beta
        jnp.zeros((3 * HIDDEN,), jnp.float32),  # 5  qkv bias
        jnp.zeros((HIDDEN,), jnp.float32),      # 6  attn out-proj bias
        jnp.ones((HIDDEN,), jnp.float32),       # 7  ln2 gamma
        jnp.zeros((HIDDEN,), jnp.float32),      # 8  ln2 beta
        jnp.zeros((FFN,), jnp.float32),         # 9  h->4h bias
        jnp.zeros((HIDDEN,), jnp.float32),      # 10 4h->h bias
        small(ks[5], IN_FEATURES),              # 11 zl2 linear bias
        jnp.ones((IN_FEATURES,), jnp.float32),  # 12 zl2 BN gamma
        jnp.zeros((IN_FEATURES,), jnp.float32), # 13 zl2 BN beta
    ]
    vecs = jnp.zeros((N_VEC_ROWS, 128), jnp.float32)
    for i, v in enumerate(rows):
        vecs = vecs.at[i, : v.shape[0]].set(v)

    return {
        "vecs": vecs,
        # ZeroLinearBatchNorm weights are filled with 0 in the module's __init__
        "zl1_wt": jnp.zeros((IN_FEATURES, HIDDEN), jnp.float32),    # transposed weight
        "w_qkv": (jax.random.normal(ks[1], (HIDDEN, 3 * HIDDEN)) * 0.02).astype(jnp.float32),
        "w_o":   (jax.random.normal(ks[2], (HIDDEN, HIDDEN)) * 0.02).astype(jnp.float32),
        "w_h4h": (jax.random.normal(ks[3], (HIDDEN, FFN)) * 0.02).astype(jnp.float32),
        "w_4hh": (jax.random.normal(ks[4], (FFN, HIDDEN)) * 0.02).astype(jnp.float32),
        "zl2_wt": jnp.zeros((HIDDEN, IN_FEATURES), jnp.float32),
    }


# ---------------- forward (single pallas_call) ----------------------------------
def identity_mapping_forward(hidden_states, params):
    # hidden_states: [S, 1, IN_FEATURES]; squeeze/unsqueeze of the unit batch dim
    # are contiguous metadata-only reshapes in the wrapper.
    x2d = hidden_states[:, 0, :]                     # [S, Fin]
    out = pl.pallas_call(
        _identity_mapping_kernel,
        out_shape=jax.ShapeDtypeStruct((SEQ, IN_FEATURES), jnp.float32),
        in_specs=[pl.BlockSpec(memory_space=pltpu.MemorySpace.VMEM)] * 8,
        out_specs=pl.BlockSpec(memory_space=pltpu.MemorySpace.VMEM),
    )(x2d, params["vecs"], params["zl1_wt"], params["w_qkv"], params["w_o"],
      params["w_h4h"], params["w_4hh"], params["zl2_wt"])
    return out[:, None, :]                           # [S, 1, Fin]


if __name__ == "__main__":
    key = jax.random.PRNGKey(0)
    k_x, k_p = jax.random.split(key)
    x = jax.random.normal(k_x, (SEQ, 1, IN_FEATURES), jnp.float32)
    params = init_params(k_p)

    fwd = jax.jit(identity_mapping_forward)
    out = fwd(x, params)
    jax.block_until_ready(out)

    assert out.shape == (SEQ, 1, IN_FEATURES), out.shape
    assert bool(jnp.all(jnp.isfinite(out)))
    print("KERNEL_OK")
</pallas_src>

<mosaic_0001>
module attributes {stable_mosaic.version = 11 : i64} {
  func.func @_identity_mapping_kernel(%arg0: memref<8x32xf32, #tpu.memory_space<vmem>>, %arg1: memref<16x128xf32, #tpu.memory_space<vmem>>, %arg2: memref<32x32xf32, #tpu.memory_space<vmem>>, %arg3: memref<32x96xf32, #tpu.memory_space<vmem>>, %arg4: memref<32x32xf32, #tpu.memory_space<vmem>>, %arg5: memref<32x128xf32, #tpu.memory_space<vmem>>, %arg6: memref<128x32xf32, #tpu.memory_space<vmem>>, %arg7: memref<32x32xf32, #tpu.memory_space<vmem>>, %arg8: memref<8x32xf32, #tpu.memory_space<vmem>>) attributes {dimension_semantics = [], scalar_prefetch = 0 : i64, scratch_operands = 0 : i64, tpu.core_type = #tpu.core_type<tc>} {
    %c0 = arith.constant 0 : index
    %c0_0 = arith.constant 0 : index
    %0 = vector.load %arg0[%c0, %c0_0] : memref<8x32xf32, #tpu.memory_space<vmem>>, vector<8x32xf32>
    %c0_1 = arith.constant 0 : index
    %c0_2 = arith.constant 0 : index
    %1 = vector.load %arg1[%c0_1, %c0_2] : memref<16x128xf32, #tpu.memory_space<vmem>>, vector<16x128xf32>
    %2 = vector.extract_strided_slice %1 {offsets = [0, 0], sizes = [1, 32], strides = [1, 1]} : vector<16x128xf32> to vector<1x32xf32>
    %3 = vector.extract_strided_slice %1 {offsets = [1, 0], sizes = [1, 32], strides = [1, 1]} : vector<16x128xf32> to vector<1x32xf32>
    %4 = vector.extract_strided_slice %1 {offsets = [2, 0], sizes = [1, 32], strides = [1, 1]} : vector<16x128xf32> to vector<1x32xf32>
    %5 = vector.extract_strided_slice %1 {offsets = [3, 0], sizes = [1, 32], strides = [1, 1]} : vector<16x128xf32> to vector<1x32xf32>
    %6 = vector.extract_strided_slice %1 {offsets = [4, 0], sizes = [1, 32], strides = [1, 1]} : vector<16x128xf32> to vector<1x32xf32>
    %7 = vector.extract_strided_slice %1 {offsets = [5, 0], sizes = [1, 96], strides = [1, 1]} : vector<16x128xf32> to vector<1x96xf32>
    %8 = vector.extract_strided_slice %1 {offsets = [6, 0], sizes = [1, 32], strides = [1, 1]} : vector<16x128xf32> to vector<1x32xf32>
    %9 = vector.extract_strided_slice %1 {offsets = [7, 0], sizes = [1, 32], strides = [1, 1]} : vector<16x128xf32> to vector<1x32xf32>
    %10 = vector.extract_strided_slice %1 {offsets = [8, 0], sizes = [1, 32], strides = [1, 1]} : vector<16x128xf32> to vector<1x32xf32>
    %11 = vector.extract_strided_slice %1 {offsets = [9, 0], sizes = [1, 128], strides = [1, 1]} : vector<16x128xf32> to vector<1x128xf32>
    %12 = vector.extract_strided_slice %1 {offsets = [10, 0], sizes = [1, 32], strides = [1, 1]} : vector<16x128xf32> to vector<1x32xf32>
    %13 = vector.extract_strided_slice %1 {offsets = [11, 0], sizes = [1, 32], strides = [1, 1]} : vector<16x128xf32> to vector<1x32xf32>
    %14 = vector.extract_strided_slice %1 {offsets = [12, 0], sizes = [1, 32], strides = [1, 1]} : vector<16x128xf32> to vector<1x32xf32>
    %15 = vector.extract_strided_slice %1 {offsets = [13, 0], sizes = [1, 32], strides = [1, 1]} : vector<16x128xf32> to vector<1x32xf32>
    %c0_3 = arith.constant 0 : index
    %c0_4 = arith.constant 0 : index
    %16 = vector.load %arg2[%c0_3, %c0_4] : memref<32x32xf32, #tpu.memory_space<vmem>>, vector<32x32xf32>
    %c0_5 = arith.constant 0 : index
    %c0_6 = arith.constant 0 : index
    %17 = vector.load %arg3[%c0_5, %c0_6] : memref<32x96xf32, #tpu.memory_space<vmem>>, vector<32x96xf32>
    %c0_7 = arith.constant 0 : index
    %c0_8 = arith.constant 0 : index
    %18 = vector.load %arg4[%c0_7, %c0_8] : memref<32x32xf32, #tpu.memory_space<vmem>>, vector<32x32xf32>
    %c0_9 = arith.constant 0 : index
    %c0_10 = arith.constant 0 : index
    %19 = vector.load %arg5[%c0_9, %c0_10] : memref<32x128xf32, #tpu.memory_space<vmem>>, vector<32x128xf32>
    %c0_11 = arith.constant 0 : index
    %c0_12 = arith.constant 0 : index
    %20 = vector.load %arg6[%c0_11, %c0_12] : memref<128x32xf32, #tpu.memory_space<vmem>>, vector<128x32xf32>
    %c0_13 = arith.constant 0 : index
    %c0_14 = arith.constant 0 : index
    %21 = vector.load %arg7[%c0_13, %c0_14] : memref<32x32xf32, #tpu.memory_space<vmem>>, vector<32x32xf32>
    %cst = arith.constant dense<0.000000e+00> : vector<8x32xf32>
    %22 = tpu.matmul %0, %16, %cst {dimension_numbers = #tpu.dot_dimension_numbers<[1], [0], [0], [1], [0, 0, 1, 1], [], []>} : vector<8x32xf32>, vector<32x32xf32>, vector<8x32xf32> -> vector<8x32xf32>
    %23 = vector.broadcast %2 : vector<1x32xf32> to vector<8x32xf32>
    %24 = arith.addf %22, %23 : vector<8x32xf32>
    %cst_15 = arith.constant dense<0.000000e+00> : vector<32xf32>
    %25 = vector.multi_reduction <add>, %24, %cst_15 [0] : vector<8x32xf32> to vector<32xf32>
    %26 = vector.shape_cast %25 : vector<32xf32> to vector<1x32xf32>
    %cst_16 = arith.constant 8.000000e+00 : f32
    %27 = vector.broadcast %cst_16 : f32 to vector<1x32xf32>
    %28 = arith.divf %26, %27 : vector<1x32xf32>
    %29 = vector.broadcast %28 : vector<1x32xf32> to vector<8x32xf32>
    %30 = arith.subf %24, %29 : vector<8x32xf32>
    %31 = arith.mulf %30, %30 : vector<8x32xf32>
    %cst_17 = arith.constant dense<0.000000e+00> : vector<32xf32>
    %32 = vector.multi_reduction <add>, %31, %cst_17 [0] : vector<8x32xf32> to vector<32xf32>
    %33 = vector.shape_cast %32 : vector<32xf32> to vector<1x32xf32>
    %cst_18 = arith.constant 8.000000e+00 : f32
    %34 = vector.broadcast %cst_18 : f32 to vector<1x32xf32>
    %35 = arith.divf %33, %34 : vector<1x32xf32>
    %36 = vector.broadcast %28 : vector<1x32xf32> to vector<8x32xf32>
    %37 = arith.subf %24, %36 : vector<8x32xf32>
    %38 = vector.broadcast %3 : vector<1x32xf32> to vector<8x32xf32>
    %39 = arith.mulf %38, %37 : vector<8x32xf32>
    %cst_19 = arith.constant 9.99999974E-6 : f32
    %40 = vector.broadcast %cst_19 : f32 to vector<1x32xf32>
    %41 = arith.addf %35, %40 : vector<1x32xf32>
    %42 = math.rsqrt %41 : vector<1x32xf32>
    %43 = vector.broadcast %42 : vector<1x32xf32> to vector<8x32xf32>
    %44 = arith.mulf %39, %43 : vector<8x32xf32>
    %45 = vector.broadcast %4 : vector<1x32xf32> to vector<8x32xf32>
    %46 = arith.addf %44, %45 : vector<8x32xf32>
    %cst_20 = arith.constant dense<0.000000e+00> : vector<8xf32>
    %47 = vector.multi_reduction <add>, %46, %cst_20 [1] : vector<8x32xf32> to vector<8xf32>
    %48 = vector.shape_cast %47 : vector<8xf32> to vector<8x1xf32>
    %cst_21 = arith.constant 3.200000e+01 : f32
    %49 = vector.broadcast %cst_21 : f32 to vector<8x1xf32>
    %50 = arith.divf %48, %49 : vector<8x1xf32>
    %51 = vector.broadcast %50 : vector<8x1xf32> to vector<8x32xf32>
    %52 = arith.subf %46, %51 : vector<8x32xf32>
    %53 = arith.mulf %52, %52 : vector<8x32xf32>
    %cst_22 = arith.constant dense<0.000000e+00> : vector<8xf32>
    %54 = vector.multi_reduction <add>, %53, %cst_22 [1] : vector<8x32xf32> to vector<8xf32>
    %55 = vector.shape_cast %54 : vector<8xf32> to vector<8x1xf32>
    %cst_23 = arith.constant 3.200000e+01 : f32
    %56 = vector.broadcast %cst_23 : f32 to vector<8x1xf32>
    %57 = arith.divf %55, %56 : vector<8x1xf32>
    %58 = vector.broadcast %50 : vector<8x1xf32> to vector<8x32xf32>
    %59 = arith.subf %46, %58 : vector<8x32xf32>
    %cst_24 = arith.constant 9.99999974E-6 : f32
    %60 = vector.broadcast %cst_24 : f32 to vector<8x1xf32>
    %61 = arith.addf %57, %60 : vector<8x1xf32>
    %62 = math.rsqrt %61 : vector<8x1xf32>
    %63 = vector.broadcast %62 : vector<8x1xf32> to vector<8x32xf32>
    %64 = arith.mulf %59, %63 : vector<8x32xf32>
    %65 = vector.broadcast %5 : vector<1x32xf32> to vector<8x32xf32>
    %66 = arith.mulf %64, %65 : vector<8x32xf32>
    %67 = vector.broadcast %6 : vector<1x32xf32> to vector<8x32xf32>
    %68 = arith.addf %66, %67 : vector<8x32xf32>
    %cst_25 = arith.constant dense<0.000000e+00> : vector<8x96xf32>
    %69 = tpu.matmul %68, %17, %cst_25 {dimension_numbers = #tpu.dot_dimension_numbers<[1], [0], [0], [1], [0, 0, 1, 1], [], []>} : vector<8x32xf32>, vector<32x96xf32>, vector<8x96xf32> -> vector<8x96xf32>
    %70 = vector.broadcast %7 : vector<1x96xf32> to vector<8x96xf32>
    %71 = arith.addf %69, %70 : vector<8x96xf32>
    %72 = tpu.iota {dimensions = array<i32: 0>} : vector<8x8xi32>
    %73 = tpu.iota {dimensions = array<i32: 1>} : vector<8x8xi32>
    %74 = arith.cmpi sle, %73, %72 : vector<8x8xi32>
    %cst_26 = arith.constant 0.000000e+00 : f32
    %cst_27 = arith.constant -1.000000e+09 : f32
    %75 = vector.broadcast %cst_26 : f32 to vector<8x8xf32>
    %76 = vector.broadcast %cst_27 : f32 to vector<8x8xf32>
    %77 = arith.select %74, %75, %76 : vector<8x8xi1>, vector<8x8xf32>
    %cst_28 = arith.constant 0.000000e+00 : f32
    %78 = vector.broadcast %cst_28 : f32 to vector<8x32xf32>
    %79 = vector.extract_strided_slice %71 {offsets = [0, 0], sizes = [8, 8], strides = [1, 1]} : vector<8x96xf32> to vector<8x8xf32>
    %80 = vector.extract_strided_slice %71 {offsets = [0, 32], sizes = [8, 8], strides = [1, 1]} : vector<8x96xf32> to vector<8x8xf32>
    %81 = vector.extract_strided_slice %71 {offsets = [0, 64], sizes = [8, 8], strides = [1, 1]} : vector<8x96xf32> to vector<8x8xf32>
    %cst_29 = arith.constant dense<0.000000e+00> : vector<8x8xf32>
    %82 = tpu.matmul %79, %80, %cst_29 {dimension_numbers = #tpu.dot_dimension_numbers<[1], [1], [0], [0], [0, 0, 1, 0], [], []>} : vector<8x8xf32>, vector<8x8xf32>, vector<8x8xf32> -> vector<8x8xf32>
    %cst_30 = arith.constant 0.353553385 : f32
    %83 = vector.broadcast %cst_30 : f32 to vector<8x8xf32>
    %84 = arith.mulf %82, %83 : vector<8x8xf32>
    %85 = arith.addf %84, %77 : vector<8x8xf32>
    %cst_31 = arith.constant dense<0xFF800000> : vector<8xf32>
    %86 = vector.multi_reduction <maximumf>, %85, %cst_31 [1] : vector<8x8xf32> to vector<8xf32>
    %87 = vector.shape_cast %86 : vector<8xf32> to vector<8x1xf32>
    %88 = vector.broadcast %87 : vector<8x1xf32> to vector<8x8xf32>
    %89 = arith.subf %85, %88 : vector<8x8xf32>
    %90 = math.exp %89 : vector<8x8xf32>
    %cst_32 = arith.constant dense<0.000000e+00> : vector<8xf32>
    %91 = vector.multi_reduction <add>, %90, %cst_32 [1] : vector<8x8xf32> to vector<8xf32>
    %92 = vector.shape_cast %91 : vector<8xf32> to vector<8x1xf32>
    %93 = tpu.reciprocal %92 {approx = true} : vector<8x1xf32> -> vector<8x1xf32>
    %94 = vector.broadcast %93 : vector<8x1xf32> to vector<8x8xf32>
    %95 = arith.mulf %90, %94 : vector<8x8xf32>
    %cst_33 = arith.constant dense<0.000000e+00> : vector<8x8xf32>
    %96 = tpu.matmul %95, %81, %cst_33 {dimension_numbers = #tpu.dot_dimension_numbers<[1], [0], [0], [1], [0, 0, 1, 1], [], []>} : vector<8x8xf32>, vector<8x8xf32>, vector<8x8xf32> -> vector<8x8xf32>
    %97 = vector.extract_strided_slice %18 {offsets = [0, 0], sizes = [8, 32], strides = [1, 1]} : vector<32x32xf32> to vector<8x32xf32>
    %cst_34 = arith.constant dense<0.000000e+00> : vector<8x32xf32>
    %98 = tpu.matmul %96, %97, %cst_34 {dimension_numbers = #tpu.dot_dimension_numbers<[1], [0], [0], [1], [0, 0, 1, 1], [], []>} : vector<8x8xf32>, vector<8x32xf32>, vector<8x32xf32> -> vector<8x32xf32>
    %99 = arith.addf %78, %98 : vector<8x32xf32>
    %100 = vector.extract_strided_slice %71 {offsets = [0, 8], sizes = [8, 8], strides = [1, 1]} : vector<8x96xf32> to vector<8x8xf32>
    %101 = vector.extract_strided_slice %71 {offsets = [0, 40], sizes = [8, 8], strides = [1, 1]} : vector<8x96xf32> to vector<8x8xf32>
    %102 = vector.extract_strided_slice %71 {offsets = [0, 72], sizes = [8, 8], strides = [1, 1]} : vector<8x96xf32> to vector<8x8xf32>
    %cst_35 = arith.constant dense<0.000000e+00> : vector<8x8xf32>
    %103 = tpu.matmul %100, %101, %cst_35 {dimension_numbers = #tpu.dot_dimension_numbers<[1], [1], [0], [0], [0, 0, 1, 0], [], []>} : vector<8x8xf32>, vector<8x8xf32>, vector<8x8xf32> -> vector<8x8xf32>
    %cst_36 = arith.constant 0.353553385 : f32
    %104 = vector.broadcast %cst_36 : f32 to vector<8x8xf32>
    %105 = arith.mulf %103, %104 : vector<8x8xf32>
    %106 = arith.addf %105, %77 : vector<8x8xf32>
    %cst_37 = arith.constant dense<0xFF800000> : vector<8xf32>
    %107 = vector.multi_reduction <maximumf>, %106, %cst_37 [1] : vector<8x8xf32> to vector<8xf32>
    %108 = vector.shape_cast %107 : vector<8xf32> to vector<8x1xf32>
    %109 = vector.broadcast %108 : vector<8x1xf32> to vector<8x8xf32>
    %110 = arith.subf %106, %109 : vector<8x8xf32>
    %111 = math.exp %110 : vector<8x8xf32>
    %cst_38 = arith.constant dense<0.000000e+00> : vector<8xf32>
    %112 = vector.multi_reduction <add>, %111, %cst_38 [1] : vector<8x8xf32> to vector<8xf32>
    %113 = vector.shape_cast %112 : vector<8xf32> to vector<8x1xf32>
    %114 = tpu.reciprocal %113 {approx = true} : vector<8x1xf32> -> vector<8x1xf32>
    %115 = vector.broadcast %114 : vector<8x1xf32> to vector<8x8xf32>
    %116 = arith.mulf %111, %115 : vector<8x8xf32>
    %cst_39 = arith.constant dense<0.000000e+00> : vector<8x8xf32>
    %117 = tpu.matmul %116, %102, %cst_39 {dimension_numbers = #tpu.dot_dimension_numbers<[1], [0], [0], [1], [0, 0, 1, 1], [], []>} : vector<8x8xf32>, vector<8x8xf32>, vector<8x8xf32> -> vector<8x8xf32>
    %118 = vector.extract_strided_slice %18 {offsets = [8, 0], sizes = [8, 32], strides = [1, 1]} : vector<32x32xf32> to vector<8x32xf32>
    %cst_40 = arith.constant dense<0.000000e+00> : vector<8x32xf32>
    %119 = tpu.matmul %117, %118, %cst_40 {dimension_numbers = #tpu.dot_dimension_numbers<[1], [0], [0], [1], [0, 0, 1, 1], [], []>} : vector<8x8xf32>, vector<8x32xf32>, vector<8x32xf32> -> vector<8x32xf32>
    %120 = arith.addf %99, %119 : vector<8x32xf32>
    %121 = vector.extract_strided_slice %71 {offsets = [0, 16], sizes = [8, 8], strides = [1, 1]} : vector<8x96xf32> to vector<8x8xf32>
    %122 = vector.extract_strided_slice %71 {offsets = [0, 48], sizes = [8, 8], strides = [1, 1]} : vector<8x96xf32> to vector<8x8xf32>
    %123 = vector.extract_strided_slice %71 {offsets = [0, 80], sizes = [8, 8], strides = [1, 1]} : vector<8x96xf32> to vector<8x8xf32>
    %cst_41 = arith.constant dense<0.000000e+00> : vector<8x8xf32>
    %124 = tpu.matmul %121, %122, %cst_41 {dimension_numbers = #tpu.dot_dimension_numbers<[1], [1], [0], [0], [0, 0, 1, 0], [], []>} : vector<8x8xf32>, vector<8x8xf32>, vector<8x8xf32> -> vector<8x8xf32>
    %cst_42 = arith.constant 0.353553385 : f32
    %125 = vector.broadcast %cst_42 : f32 to vector<8x8xf32>
    %126 = arith.mulf %124, %125 : vector<8x8xf32>
    %127 = arith.addf %126, %77 : vector<8x8xf32>
    %cst_43 = arith.constant dense<0xFF800000> : vector<8xf32>
    %128 = vector.multi_reduction <maximumf>, %127, %cst_43 [1] : vector<8x8xf32> to vector<8xf32>
    %129 = vector.shape_cast %128 : vector<8xf32> to vector<8x1xf32>
    %130 = vector.broadcast %129 : vector<8x1xf32> to vector<8x8xf32>
    %131 = arith.subf %127, %130 : vector<8x8xf32>
    %132 = math.exp %131 : vector<8x8xf32>
    %cst_44 = arith.constant dense<0.000000e+00> : vector<8xf32>
    %133 = vector.multi_reduction <add>, %132, %cst_44 [1] : vector<8x8xf32> to vector<8xf32>
    %134 = vector.shape_cast %133 : vector<8xf32> to vector<8x1xf32>
    %135 = tpu.reciprocal %134 {approx = true} : vector<8x1xf32> -> vector<8x1xf32>
    %136 = vector.broadcast %135 : vector<8x1xf32> to vector<8x8xf32>
    %137 = arith.mulf %132, %136 : vector<8x8xf32>
    %cst_45 = arith.constant dense<0.000000e+00> : vector<8x8xf32>
    %138 = tpu.matmul %137, %123, %cst_45 {dimension_numbers = #tpu.dot_dimension_numbers<[1], [0], [0], [1], [0, 0, 1, 1], [], []>} : vector<8x8xf32>, vector<8x8xf32>, vector<8x8xf32> -> vector<8x8xf32>
    %139 = vector.extract_strided_slice %18 {offsets = [16, 0], sizes = [8, 32], strides = [1, 1]} : vector<32x32xf32> to vector<8x32xf32>
    %cst_46 = arith.constant dense<0.000000e+00> : vector<8x32xf32>
    %140 = tpu.matmul %138, %139, %cst_46 {dimension_numbers = #tpu.dot_dimension_numbers<[1], [0], [0], [1], [0, 0, 1, 1], [], []>} : vector<8x8xf32>, vector<8x32xf32>, vector<8x32xf32> -> vector<8x32xf32>
    %141 = arith.addf %120, %140 : vector<8x32xf32>
    %142 = vector.extract_strided_slice %71 {offsets = [0, 24], sizes = [8, 8], strides = [1, 1]} : vector<8x96xf32> to vector<8x8xf32>
    %143 = vector.extract_strided_slice %71 {offsets = [0, 56], sizes = [8, 8], strides = [1, 1]} : vector<8x96xf32> to vector<8x8xf32>
    %144 = vector.extract_strided_slice %71 {offsets = [0, 88], sizes = [8, 8], strides = [1, 1]} : vector<8x96xf32> to vector<8x8xf32>
    %cst_47 = arith.constant dense<0.000000e+00> : vector<8x8xf32>
    %145 = tpu.matmul %142, %143, %cst_47 {dimension_numbers = #tpu.dot_dimension_numbers<[1], [1], [0], [0], [0, 0, 1, 0], [], []>} : vector<8x8xf32>, vector<8x8xf32>, vector<8x8xf32> -> vector<8x8xf32>
    %cst_48 = arith.constant 0.353553385 : f32
    %146 = vector.broadcast %cst_48 : f32 to vector<8x8xf32>
    %147 = arith.mulf %145, %146 : vector<8x8xf32>
    %148 = arith.addf %147, %77 : vector<8x8xf32>
    %cst_49 = arith.constant dense<0xFF800000> : vector<8xf32>
    %149 = vector.multi_reduction <maximumf>, %148, %cst_49 [1] : vector<8x8xf32> to vector<8xf32>
    %150 = vector.shape_cast %149 : vector<8xf32> to vector<8x1xf32>
    %151 = vector.broadcast %150 : vector<8x1xf32> to vector<8x8xf32>
    %152 = arith.subf %148, %151 : vector<8x8xf32>
    %153 = math.exp %152 : vector<8x8xf32>
    %cst_50 = arith.constant dense<0.000000e+00> : vector<8xf32>
    %154 = vector.multi_reduction <add>, %153, %cst_50 [1] : vector<8x8xf32> to vector<8xf32>
    %155 = vector.shape_cast %154 : vector<8xf32> to vector<8x1xf32>
    %156 = tpu.reciprocal %155 {approx = true} : vector<8x1xf32> -> vector<8x1xf32>
    %157 = vector.broadcast %156 : vector<8x1xf32> to vector<8x8xf32>
    %158 = arith.mulf %153, %157 : vector<8x8xf32>
    %cst_51 = arith.constant dense<0.000000e+00> : vector<8x8xf32>
    %159 = tpu.matmul %158, %144, %cst_51 {dimension_numbers = #tpu.dot_dimension_numbers<[1], [0], [0], [1], [0, 0, 1, 1], [], []>} : vector<8x8xf32>, vector<8x8xf32>, vector<8x8xf32> -> vector<8x8xf32>
    %160 = vector.extract_strided_slice %18 {offsets = [24, 0], sizes = [8, 32], strides = [1, 1]} : vector<32x32xf32> to vector<8x32xf32>
    %cst_52 = arith.constant dense<0.000000e+00> : vector<8x32xf32>
    %161 = tpu.matmul %159, %160, %cst_52 {dimension_numbers = #tpu.dot_dimension_numbers<[1], [0], [0], [1], [0, 0, 1, 1], [], []>} : vector<8x8xf32>, vector<8x32xf32>, vector<8x32xf32> -> vector<8x32xf32>
    %162 = arith.addf %141, %161 : vector<8x32xf32>
    %163 = vector.broadcast %8 : vector<1x32xf32> to vector<8x32xf32>
    %164 = arith.addf %162, %163 : vector<8x32xf32>
    %cst_53 = arith.constant 2.000000e+00 : f32
    %165 = vector.broadcast %cst_53 : f32 to vector<8x32xf32>
    %166 = arith.mulf %68, %165 : vector<8x32xf32>
    %167 = arith.addf %166, %164 : vector<8x32xf32>
    %cst_54 = arith.constant dense<0.000000e+00> : vector<8xf32>
    %168 = vector.multi_reduction <add>, %167, %cst_54 [1] : vector<8x32xf32> to vector<8xf32>
    %169 = vector.shape_cast %168 : vector<8xf32> to vector<8x1xf32>
    %cst_55 = arith.constant 3.200000e+01 : f32
    %170 = vector.broadcast %cst_55 : f32 to vector<8x1xf32>
    %171 = arith.divf %169, %170 : vector<8x1xf32>
    %172 = vector.broadcast %171 : vector<8x1xf32> to vector<8x32xf32>
    %173 = arith.subf %167, %172 : vector<8x32xf32>
    %174 = arith.mulf %173, %173 : vector<8x32xf32>
    %cst_56 = arith.constant dense<0.000000e+00> : vector<8xf32>
    %175 = vector.multi_reduction <add>, %174, %cst_56 [1] : vector<8x32xf32> to vector<8xf32>
    %176 = vector.shape_cast %175 : vector<8xf32> to vector<8x1xf32>
    %cst_57 = arith.constant 3.200000e+01 : f32
    %177 = vector.broadcast %cst_57 : f32 to vector<8x1xf32>
    %178 = arith.divf %176, %177 : vector<8x1xf32>
    %179 = vector.broadcast %171 : vector<8x1xf32> to vector<8x32xf32>
    %180 = arith.subf %167, %179 : vector<8x32xf32>
    %cst_58 = arith.constant 9.99999974E-6 : f32
    %181 = vector.broadcast %cst_58 : f32 to vector<8x1xf32>
    %182 = arith.addf %178, %181 : vector<8x1xf32>
    %183 = math.rsqrt %182 : vector<8x1xf32>
    %184 = vector.broadcast %183 : vector<8x1xf32> to vector<8x32xf32>
    %185 = arith.mulf %180, %184 : vector<8x32xf32>
    %186 = vector.broadcast %9 : vector<1x32xf32> to vector<8x32xf32>
    %187 = arith.mulf %185, %186 : vector<8x32xf32>
    %188 = vector.broadcast %10 : vector<1x32xf32> to vector<8x32xf32>
    %189 = arith.addf %187, %188 : vector<8x32xf32>
    %cst_59 = arith.constant dense<0.000000e+00> : vector<8x128xf32>
    %190 = tpu.matmul %189, %19, %cst_59 {dimension_numbers = #tpu.dot_dimension_numbers<[1], [0], [0], [1], [0, 0, 1, 1], [], []>} : vector<8x32xf32>, vector<32x128xf32>, vector<8x128xf32> -> vector<8x128xf32>
    %191 = vector.broadcast %11 : vector<1x128xf32> to vector<8x128xf32>
    %192 = arith.addf %190, %191 : vector<8x128xf32>
    %193 = arith.mulf %192, %192 : vector<8x128xf32>
    %194 = arith.mulf %192, %193 : vector<8x128xf32>
    %cst_60 = arith.constant 4.471500e-02 : f32
    %195 = vector.broadcast %cst_60 : f32 to vector<8x128xf32>
    %196 = arith.mulf %195, %194 : vector<8x128xf32>
    %197 = arith.addf %192, %196 : vector<8x128xf32>
    %cst_61 = arith.constant 0.797884583 : f32
    %198 = vector.broadcast %cst_61 : f32 to vector<8x128xf32>
    %199 = arith.mulf %198, %197 : vector<8x128xf32>
    %200 = math.tanh %199 : vector<8x128xf32>
    %cst_62 = arith.constant 1.000000e+00 : f32
    %201 = vector.broadcast %cst_62 : f32 to vector<8x128xf32>
    %202 = arith.addf %201, %200 : vector<8x128xf32>
    %cst_63 = arith.constant 5.000000e-01 : f32
    %203 = vector.broadcast %cst_63 : f32 to vector<8x128xf32>
    %204 = arith.mulf %203, %202 : vector<8x128xf32>
    %205 = arith.mulf %192, %204 : vector<8x128xf32>
    %cst_64 = arith.constant dense<0.000000e+00> : vector<8x32xf32>
    %206 = tpu.matmul %205, %20, %cst_64 {dimension_numbers = #tpu.dot_dimension_numbers<[1], [0], [0], [1], [0, 0, 1, 1], [], []>} : vector<8x128xf32>, vector<128x32xf32>, vector<8x32xf32> -> vector<8x32xf32>
    %207 = vector.broadcast %12 : vector<1x32xf32> to vector<8x32xf32>
    %208 = arith.addf %206, %207 : vector<8x32xf32>
    %cst_65 = arith.constant 2.000000e+00 : f32
    %209 = vector.broadcast %cst_65 : f32 to vector<8x32xf32>
    %210 = arith.mulf %189, %209 : vector<8x32xf32>
    %211 = arith.addf %210, %208 : vector<8x32xf32>
    %cst_66 = arith.constant dense<0.000000e+00> : vector<8x32xf32>
    %212 = tpu.matmul %211, %21, %cst_66 {dimension_numbers = #tpu.dot_dimension_numbers<[1], [0], [0], [1], [0, 0, 1, 1], [], []>} : vector<8x32xf32>, vector<32x32xf32>, vector<8x32xf32> -> vector<8x32xf32>
    %213 = vector.broadcast %13 : vector<1x32xf32> to vector<8x32xf32>
    %214 = arith.addf %212, %213 : vector<8x32xf32>
    %cst_67 = arith.constant dense<0.000000e+00> : vector<32xf32>
    %215 = vector.multi_reduction <add>, %214, %cst_67 [0] : vector<8x32xf32> to vector<32xf32>
    %216 = vector.shape_cast %215 : vector<32xf32> to vector<1x32xf32>
    %cst_68 = arith.constant 8.000000e+00 : f32
    %217 = vector.broadcast %cst_68 : f32 to vector<1x32xf32>
    %218 = arith.divf %216, %217 : vector<1x32xf32>
    %219 = vector.broadcast %218 : vector<1x32xf32> to vector<8x32xf32>
    %220 = arith.subf %214, %219 : vector<8x32xf32>
    %221 = arith.mulf %220, %220 : vector<8x32xf32>
    %cst_69 = arith.constant dense<0.000000e+00> : vector<32xf32>
    %222 = vector.multi_reduction <add>, %221, %cst_69 [0] : vector<8x32xf32> to vector<32xf32>
    %223 = vector.shape_cast %222 : vector<32xf32> to vector<1x32xf32>
    %cst_70 = arith.constant 8.000000e+00 : f32
    %224 = vector.broadcast %cst_70 : f32 to vector<1x32xf32>
    %225 = arith.divf %223, %224 : vector<1x32xf32>
    %226 = vector.broadcast %218 : vector<1x32xf32> to vector<8x32xf32>
    %227 = arith.subf %214, %226 : vector<8x32xf32>
    %228 = vector.broadcast %14 : vector<1x32xf32> to vector<8x32xf32>
    %229 = arith.mulf %228, %227 : vector<8x32xf32>
    %cst_71 = arith.constant 9.99999974E-6 : f32
    %230 = vector.broadcast %cst_71 : f32 to vector<1x32xf32>
    %231 = arith.addf %225, %230 : vector<1x32xf32>
    %232 = math.rsqrt %231 : vector<1x32xf32>
    %233 = vector.broadcast %232 : vector<1x32xf32> to vector<8x32xf32>
    %234 = arith.mulf %229, %233 : vector<8x32xf32>
    %235 = vector.broadcast %15 : vector<1x32xf32> to vector<8x32xf32>
    %236 = arith.addf %234, %235 : vector<8x32xf32>
    %237 = arith.addf %236, %0 : vector<8x32xf32>
    %c0_72 = arith.constant 0 : index
    %c0_73 = arith.constant 0 : index
    %238 = vector.load %arg8[%c0_72, %c0_73] : memref<8x32xf32, #tpu.memory_space<vmem>>, vector<8x32xf32>
    tpu.vector_store %arg8[%c0_72, %c0_73], %237 {strides = array<i32>} : memref<8x32xf32, #tpu.memory_space<vmem>>, vector<8x32xf32>,
    return
  }
}

</mosaic_0001>

<llo_original>
// kernel: identity_mapping_forward.1
$region0: #{identity_mapping_forward.1}
  #allocation0 [shape = 'u32[]', space=smem, size = 0x4, offset = 0x4, fixed_abs, tag = 'smem constant byte address 0x4 - core index']
  #allocation1 [shape = 'u32[144,128]{1,0:T(1,128)}', space=vmem, size = 0x12000, scoped, tag = 'internal scratch']
  %s0 = inlined_call_operand.hbm [shape: f32[8,32], index: 0, kind: input, shape index: {}]
  %s1 = inlined_call_operand.hbm [shape: f32[16,128], index: 1, kind: input, shape index: {}]
  %s2 = inlined_call_operand.vmem [shape: f32[32,32], index: 2, kind: input, shape index: {}]
  %s3 = inlined_call_operand.vmem [shape: f32[32,96], index: 3, kind: input, shape index: {}]
  %s4 = inlined_call_operand.vmem [shape: f32[32,32], index: 4, kind: input, shape index: {}]
  %s5 = inlined_call_operand.vmem [shape: f32[32,128], index: 5, kind: input, shape index: {}]
  %s6 = inlined_call_operand.vmem [shape: f32[128,32], index: 6, kind: input, shape index: {}]
  %s7 = inlined_call_operand.vmem [shape: f32[32,32], index: 7, kind: input, shape index: {}]
  %s8 = inlined_call_operand.hbm [shape: f32[8,32], index: 8, kind: output, shape index: {}]
  %s9 = sld [smem:[#allocation0]]
  $region50: #{identity_mapping_forward.1} parent=0
    _
  %s11 = ssub.s32 1, %s9
  %s12 = scalar_select 0, %s11, %s9
  $region1: #{identity_mapping_forward.1} parent=0
    #allocation2 [shape = 'u8[4096]{0}', space=vmem, size = 0x1000, scoped, tag = 'input window, operand 0, single buffered']
    #allocation3 [shape = 's32[1]{0}', space=sflag, size = 0x4, scoped, tag = 'scoped memory for identity_mapping_forward.1']
    #allocation4 [shape = 's32[1]{0}', space=sflag, size = 0x4, scoped, tag = 'scoped memory for identity_mapping_forward.1']
    #allocation5 [shape = 'u8[8192]{0}', space=vmem, size = 0x2000, scoped, tag = 'input window, operand 1, single buffered']
    #allocation6 [shape = 's32[1]{0}', space=sflag, size = 0x4, scoped, tag = 'scoped memory for identity_mapping_forward.1']
    #allocation7 [shape = 'u8[4096]{0}', space=vmem, size = 0x1000, scoped, tag = 'output window, operand 0, single buffered']
    %13 = vsyncpa [#allocation3], 0
    %14 = vsyncpa [#allocation6], 0
    %15 = vsyncpa [#allocation4], 0
    // Predicated region
    $region2: #{identity_mapping_forward.1} parent=1 // pred_check
      _
    $region3: #{identity_mapping_forward.1} parent=1 // pred_check_branch
      %17 = sbr.rel (0) target = $region5
    $region4: #{identity_mapping_forward.1} parent=1 // pred_region
      %s19 = ssub.s32 128, 128
      %20 = vsyncadd [#allocation3], %s19
      %s22 = sshll.u32 [#allocation2], 4
      %s23 = int_to_ptr.vmem [resolvable:$true] %s22
      %25 = dma.hbm_to_vmem [thread:$0]  %s0, 128, %s23, [#allocation3]
    $region5: #{identity_mapping_forward.1} parent=1 // pred_fallthru
      _
    // Predicated region
    $region6: #{identity_mapping_forward.1} parent=1 // pred_check
      _
    $region7: #{identity_mapping_forward.1} parent=1 // pred_check_branch
      %27 = sbr.rel (0) target = $region9
    $region8: #{identity_mapping_forward.1} parent=1 // pred_region
      %s29 = ssub.s32 256, 256
      %30 = vsyncadd [#allocation6], %s29
      %s31 = sshll.u32 [#allocation5], 4
      %s32 = int_to_ptr.vmem [resolvable:$true] %s31
      %37 = dma.hbm_to_vmem [thread:$0]  %s1, 256, %s32, [#allocation6], 128, 128, 8
    $region9: #{identity_mapping_forward.1} parent=1 // pred_fallthru
      _
    // Predicated region
    $region10: #{identity_mapping_forward.1} parent=1 // pred_check
      _
    $region11: #{identity_mapping_forward.1} parent=1 // pred_check_branch
      %39 = sbr.rel (0) target = $region13
    $region12: #{identity_mapping_forward.1} parent=1 // pred_region
      _
    $region13: #{identity_mapping_forward.1} parent=1 // pred_fallthru
      _
    // Predicated region
    $region14: #{identity_mapping_forward.1} parent=1 // pred_check
      _
    $region15: #{identity_mapping_forward.1} parent=1 // pred_check_branch
      %41 = sbr.rel (0) target = $region17
    $region16: #{identity_mapping_forward.1} parent=1 // pred_region
      _
    $region17: #{identity_mapping_forward.1} parent=1 // pred_fallthru
      _
    // Predicated region
    $region18: #{identity_mapping_forward.1} parent=1 // pred_check
      _
    $region19: #{identity_mapping_forward.1} parent=1 // pred_check_branch
      %43 = sbr.rel (0) target = $region21
    $region20: #{identity_mapping_forward.1} parent=1 // pred_region
      _
    $region21: #{identity_mapping_forward.1} parent=1 // pred_fallthru
      _
    // Predicated region
    $region22: #{identity_mapping_forward.1} parent=1 // pred_check
      _
    $region23: #{identity_mapping_forward.1} parent=1 // pred_check_branch
      %45 = sbr.rel (0) target = $region25
    $region24: #{identity_mapping_forward.1} parent=1 // pred_region
      _
    $region25: #{identity_mapping_forward.1} parent=1 // pred_fallthru
      _
    // Predicated region
    $region26: #{identity_mapping_forward.1} parent=1 // pred_check
      _
    $region27: #{identity_mapping_forward.1} parent=1 // pred_check_branch
      %47 = sbr.rel (0) target = $region29
    $region28: #{identity_mapping_forward.1} parent=1 // pred_region
      _
    $region29: #{identity_mapping_forward.1} parent=1 // pred_fallthru
      _
    // Predicated region
    $region30: #{identity_mapping_forward.1} parent=1 // pred_check
      _
    $region31: #{identity_mapping_forward.1} parent=1 // pred_check_branch
      %49 = sbr.rel (0) target = $region33
    $region32: #{identity_mapping_forward.1} parent=1 // pred_region
      _
    $region33: #{identity_mapping_forward.1} parent=1 // pred_fallthru
      _
    // Predicated region
    $region34: #{identity_mapping_forward.1} parent=1 // pred_check
      _
    $region35: #{identity_mapping_forward.1} parent=1 // pred_check_branch
      %51 = sbr.rel (0) target = $region37
    $region36: #{identity_mapping_forward.1} parent=1 // pred_region
      %52 = dma.done [#allocation3], 128
    $region37: #{identity_mapping_forward.1} parent=1 // pred_fallthru
      _
    // Predicated region
    $region38: #{identity_mapping_forward.1} parent=1 // pred_check
      _
    $region39: #{identity_mapping_forward.1} parent=1 // pred_check_branch
      %54 = sbr.rel (0) target = $region41
    $region40: #{identity_mapping_forward.1} parent=1 // pred_region
      %55 = dma.done [#allocation6], 256
    $region41: #{identity_mapping_forward.1} parent=1 // pred_fallthru
      _
    %v56 = vld [vmem:[#allocation2] sm:$0xff]
    %v57 = vld [vmem:[#allocation5] sm:$0xff]
    %v58 = vld [vmem:[#allocation5 + $0x8] sm:$0xff]
    %v59 = vld [vmem:[%s2] sm:$0xff]
    %v60 = vld [vmem:[%s2 + $0x8] sm:$0xff]
    %v61 = vld [vmem:[%s2 + $0x10] sm:$0xff]
    %v62 = vld [vmem:[%s2 + $0x18] sm:$0xff]
    %v63 = vld [vmem:[%s3] sm:$0xff]
    %v64 = vld [vmem:[%s3 + $0x8] sm:$0xff]
    %v65 = vld [vmem:[%s3 + $0x10] sm:$0xff]
    %v66 = vld [vmem:[%s3 + $0x18] sm:$0xff]
    %v67 = vld [vmem:[%s4] sm:$0xff]
    %v68 = vld [vmem:[%s4 + $0x8] sm:$0xff]
    %v69 = vld [vmem:[%s4 + $0x10] sm:$0xff]
    %v70 = vld [vmem:[%s4 + $0x18] sm:$0xff]
    %v71 = vld [vmem:[%s5] sm:$0xff]
    %v72 = vld [vmem:[%s5 + $0x8] sm:$0xff]
    %v73 = vld [vmem:[%s5 + $0x10] sm:$0xff]
    %v74 = vld [vmem:[%s5 + $0x18] sm:$0xff]
    %v75 = vld [vmem:[%s6] sm:$0xff]
    %v76 = vld [vmem:[%s6 + $0x8] sm:$0xff]
    %v77 = vld [vmem:[%s6 + $0x10] sm:$0xff]
    %v78 = vld [vmem:[%s6 + $0x18] sm:$0xff]
    %v79 = vld [vmem:[%s6 + $0x20] sm:$0xff]
    %v80 = vld [vmem:[%s6 + $0x28] sm:$0xff]
    %v81 = vld [vmem:[%s6 + $0x30] sm:$0xff]
    %v82 = vld [vmem:[%s6 + $0x38] sm:$0xff]
    %v83 = vld [vmem:[%s6 + $0x40] sm:$0xff]
    %v84 = vld [vmem:[%s6 + $0x48] sm:$0xff]
    %v85 = vld [vmem:[%s6 + $0x50] sm:$0xff]
    %v86 = vld [vmem:[%s6 + $0x58] sm:$0xff]
    %v87 = vld [vmem:[%s6 + $0x60] sm:$0xff]
    %v88 = vld [vmem:[%s6 + $0x68] sm:$0xff]
    %v89 = vld [vmem:[%s6 + $0x70] sm:$0xff]
    %v90 = vld [vmem:[%s6 + $0x78] sm:$0xff]
    %v91 = vld [vmem:[%s7] sm:$0xff]
    %v92 = vld [vmem:[%s7 + $0x8] sm:$0xff]
    %v93 = vld [vmem:[%s7 + $0x10] sm:$0xff]
    %v94 = vld [vmem:[%s7 + $0x18] sm:$0xff]
    %v95 = vlaneseq
    %v96 = vshrl.u32 %v95, 7
    %v97 = vsub.s32 0, %v96
    %v98 = vrot.slane %v57, %v97
    %vm99 = vcmask 261120
    %v101 = vsel %vm99, %v56, 0
    %103 = vmatprep.subr.mxu0 0.0
    %104 = vmatpush1.msra.mxu0 %v59
    %105 = vmatprep.subr.mxu0 0.0
    %106 = vmatpush1.msra.mxu0 %v60
    %107 = vmatprep.subr.mxu0 0.0
    %108 = vmatpush1.msra.mxu0 %v61
    %109 = vmatprep.subr.mxu0 0.0
    %110 = vmatpush1.msra.mxu0 %v62
    %111 = vmatprep.subr.mxu0 0.0
    %112 = vmatpush1.msra.mxu0 0.0
    %113 = vmatprep.subr.mxu0 0.0
    %114 = vmatpush1.msra.mxu0 0.0
    %115 = vmatprep.subr.mxu0 0.0
    %116 = vmatpush1.msra.mxu0 0.0
    %117 = vmatprep.subr.mxu0 0.0
    %118 = vmatpush1.msra.mxu0 0.0
    %119 = vmatprep.subr.mxu0 0.0
    %120 = vmatpush1.msra.mxu0 0.0
    %121 = vmatprep.subr.mxu0 0.0
    %122 = vmatpush1.msra.mxu0 0.0
    %123 = vmatprep.subr.mxu0 0.0
    %124 = vmatpush1.msra.mxu0 0.0
    %125 = vmatprep.subr.mxu0 0.0
    %126 = vmatpush1.msra.mxu0 0.0
    %127 = vmatprep.subr.mxu0 0.0
    %128 = vmatpush1.msra.mxu0 0.0
    %129 = vmatprep.subr.mxu0 0.0
    %130 = vmatpush1.msra.mxu0 0.0
    %131 = vmatprep.subr.mxu0 0.0
    %132 = vmatpush1.msra.mxu0 0.0
    %133 = vmatprep.subr.mxu0 0.0
    %134 = vmatpush1.msra.mxu0 0.0
    %135 = vmatprep.subr.mxu0 0.0
    %136 = vmatpush1.msra.mxu0 0.0
    %137 = vmatprep.subr.mxu0 0.0
    %138 = vmatpush1.msra.mxu0 0.0
    %139 = vmatprep.subr.mxu0 0.0
    %140 = vmatpush1.msra.mxu0 0.0
    %141 = vmatprep.subr.mxu0 0.0
    %142 = vmatpush1.msra.mxu0 0.0
    %143 = vmatprep.subr.mxu0 0.0
    %144 = vmatpush1.msra.mxu0 0.0
    %145 = vmatprep.subr.mxu0 0.0
    %146 = vmatpush1.msra.mxu0 0.0
    %147 = vmatprep.subr.mxu0 0.0
    %148 = vmatpush1.msra.mxu0 0.0
    %149 = vmatprep.subr.mxu0 0.0
    %150 = vmatpush1.msra.mxu0 0.0
    %151 = vmatprep.subr.mxu0 0.0
    %152 = vmatpush1.msra.mxu0 0.0
    %153 = vmatprep.subr.mxu0 0.0
    %154 = vmatpush1.msra.mxu0 0.0
    %155 = vmatprep.subr.mxu0 0.0
    %156 = vmatpush1.msra.mxu0 0.0
    %157 = vmatprep.subr.mxu0 0.0
    %158 = vmatpush1.msra.mxu0 0.0
    %159 = vmatprep.subr.mxu0 0.0
    %160 = vmatpush1.msra.mxu0 0.0
    %161 = vmatprep.subr.mxu0 0.0
    %162 = vmatpush1.msra.mxu0 0.0
    %163 = vmatprep.subr.mxu0 0.0
    %164 = vmatpush1.msra.mxu0 0.0
    %165 = vmatprep.subr.mxu0 0.0
    %166 = vmatpush1.msra.mxu0 0.0
    %167 = vmatprep.mubr.f32.mxu0 0.0
    %168 = vmatmul.mubr.f32.gmra.mrb[0].mxu0 %v101
    %v169 = vpop.f32.mrb[0].mxu0
    %v170 = vadd.f32 %v98, %v169
    %v171 = vpop.f32.mrb[0].mxu0
    %172 = vdwg.mxu0
    %v173 = vsel %vm99, %v170, 0.0
    %v174 = vrot.slane %v173, 4
    %v175 = vadd.f32 %v173, %v174
    %v176 = vrot.slane %v175, 2
    %v177 = vadd.f32 %v175, %v176
    %v178 = vrot.slane %v177, 1
    %v179 = vadd.f32 %v177, %v178
    %v180 = vrcp.pop 8.0
    %v181 = vmul.f32 %v179, %v180
    %v182 = vsub.f32 %v170, %v181
    %v183 = vmul.f32 %v182, %v182
    %v184 = vsel %vm99, %v183, 0.0
    %v185 = vrot.slane %v184, 4
    %v186 = vadd.f32 %v184, %v185
    %v187 = vrot.slane %v186, 2
    %v188 = vadd.f32 %v186, %v187
    %v189 = vrot.slane %v188, 1
    %v190 = vadd.f32 %v188, %v189
    %v191 = vmul.f32 %v190, %v180
    %v192 = vlaneseq
    %v193 = vshrl.u32 %v192, 7
    %v194 = vsub.s32 1, %v193
    %v195 = vrot.slane %v57, %v194
    %v196 = vmul.f32 %v195, %v182
    %v197 = vadd.f32 %v191, 1e-05
    %v198 = vrsqrt.pop %v197
    %v199 = vmul.f32 %v196, %v198
    %v200 = vlaneseq
    %v201 = vshrl.u32 %v200, 7
    %v202 = vsub.s32 2, %v201
    %v203 = vrot.slane %v57, %v202
    %v204 = vadd.f32 %v199, %v203
    %v205 = vsel %vm99, %v204, 0.0
    %206 = vadd.xlane.f32.xlu0 %v205
    %v207 = vpop.xlane.xlu0 %206
    %v208 = vrcp.pop 32.0
    %v209 = vmul.f32 %v207, %v208
    %v210 = vsub.f32 %v204, %v209
    %v211 = vmul.f32 %v210, %v210
    %v212 = vsel %vm99, %v211, 0.0
    %213 = vadd.xlane.f32.xlu0 %v212
    %v214 = vpop.xlane.xlu0 %213
    %v215 = vmul.f32 %v214, %v208
    %v216 = vadd.f32 %v215, 1e-05
    %v217 = vrsqrt.pop %v216
    %v218 = vmul.f32 %v210, %v217
    %v219 = vlaneseq
    %v220 = vshrl.u32 %v219, 7
    %v221 = vsub.s32 3, %v220
    %v222 = vrot.slane %v57, %v221
    %v223 = vmul.f32 %v218, %v222
    %v224 = vlaneseq
    %v225 = vshrl.u32 %v224, 7
    %v226 = vsub.s32 4, %v225
    %v227 = vrot.slane %v57, %v226
    %v228 = vadd.f32 %v223, %v227
    %v229 = vlaneseq
    %v230 = vshrl.u32 %v229, 7
    %v231 = vsub.s32 5, %v230
    %v232 = vrot.slane %v57, %v231
    %v234 = vsel %vm99, %v228, 0
    %236 = vmatprep.subr.mxu0 0.0
    %237 = vmatpush1.msra.mxu0 %v63
    %238 = vmatprep.subr.mxu0 0.0
    %239 = vmatpush1.msra.mxu0 %v64
    %240 = vmatprep.subr.mxu0 0.0
    %241 = vmatpush1.msra.mxu0 %v65
    %242 = vmatprep.subr.mxu0 0.0
    %243 = vmatpush1.msra.mxu0 %v66
    %244 = vmatprep.subr.mxu0 0.0
    %245 = vmatpush1.msra.mxu0 0.0
    %246 = vmatprep.subr.mxu0 0.0
    %247 = vmatpush1.msra.mxu0 0.0
    %248 = vmatprep.subr.mxu0 0.0
    %249 = vmatpush1.msra.mxu0 0.0
    %250 = vmatprep.subr.mxu0 0.0
    %251 = vmatpush1.msra.mxu0 0.0
    %252 = vmatprep.subr.mxu0 0.0
    %253 = vmatpush1.msra.mxu0 0.0
    %254 = vmatprep.subr.mxu0 0.0
    %255 = vmatpush1.msra.mxu0 0.0
    %256 = vmatprep.subr.mxu0 0.0
    %257 = vmatpush1.msra.mxu0 0.0
    %258 = vmatprep.subr.mxu0 0.0
    %259 = vmatpush1.msra.mxu0 0.0
    %260 = vmatprep.subr.mxu0 0.0
    %261 = vmatpush1.msra.mxu0 0.0
    %262 = vmatprep.subr.mxu0 0.0
    %263 = vmatpush1.msra.mxu0 0.0
    %264 = vmatprep.subr.mxu0 0.0
    %265 = vmatpush1.msra.mxu0 0.0
    %266 = vmatprep.subr.mxu0 0.0
    %267 = vmatpush1.msra.mxu0 0.0
    %268 = vmatprep.subr.mxu0 0.0
    %269 = vmatpush1.msra.mxu0 0.0
    %270 = vmatprep.subr.mxu0 0.0
    %271 = vmatpush1.msra.mxu0 0.0
    %272 = vmatprep.subr.mxu0 0.0
    %273 = vmatpush1.msra.mxu0 0.0
    %274 = vmatprep.subr.mxu0 0.0
    %275 = vmatpush1.msra.mxu0 0.0
    %276 = vmatprep.subr.mxu0 0.0
    %277 = vmatpush1.msra.mxu0 0.0
    %278 = vmatprep.subr.mxu0 0.0
    %279 = vmatpush1.msra.mxu0 0.0
    %280 = vmatprep.subr.mxu0 0.0
    %281 = vmatpush1.msra.mxu0 0.0
    %282 = vmatprep.subr.mxu0 0.0
    %283 = vmatpush1.msra.mxu0 0.0
    %284 = vmatprep.subr.mxu0 0.0
    %285 = vmatpush1.msra.mxu0 0.0
    %286 = vmatprep.subr.mxu0 0.0
    %287 = vmatpush1.msra.mxu0 0.0
    %288 = vmatprep.subr.mxu0 0.0
    %289 = vmatpush1.msra.mxu0 0.0
    %290 = vmatprep.subr.mxu0 0.0
    %291 = vmatpush1.msra.mxu0 0.0
    %292 = vmatprep.subr.mxu0 0.0
    %293 = vmatpush1.msra.mxu0 0.0
    %294 = vmatprep.subr.mxu0 0.0
    %295 = vmatpush1.msra.mxu0 0.0
    %296 = vmatprep.subr.mxu0 0.0
    %297 = vmatpush1.msra.mxu0 0.0
    %298 = vmatprep.subr.mxu0 0.0
    %299 = vmatpush1.msra.mxu0 0.0
    %300 = vmatprep.mubr.f32.mxu0 0.0
    %301 = vmatmul.mubr.f32.gmra.mrb[0].mxu0 %v234
    %v302 = vpop.f32.mrb[0].mxu0
    %v303 = vadd.f32 %v232, %v302
    %v304 = vpop.f32.mrb[0].mxu0
    %305 = vdwg.mxu0
    %v306 = vlaneseq
    %v307 = vshrl.u32 %v306, 7
    %v308 = vlaneseq
    %v309 = vand.u32 %v308, 127
    %vm310 = vcmp.le.s32.totalorder %v309, %v307
    %v311 = vsel %vm310, 0.0, -1e+09
    %313 = vrot.lane.b32.xlu0 %v303, 96
    %v314 = vpop.permute.xlu0 %313
    %vm315 = vcmask 64512
    %v316 = vsel %vm315, %v303, 0
    %v318 = vsel %vm315, %v314, 0
    %320 = vmatprep.subr.mxu0 0.0
    %321 = vmatpush1.xpose.msra.mxu0 %v318
    %322 = vmatprep.subr.mxu0 0.0
    %323 = vmatpush1.xpose.msra.mxu0 0.0
    %324 = vmatprep.subr.mxu0 0.0
    %325 = vmatpush1.xpose.msra.mxu0 0.0
    %326 = vmatprep.subr.mxu0 0.0
    %327 = vmatpush1.xpose.msra.mxu0 0.0
    %328 = vmatprep.subr.mxu0 0.0
    %329 = vmatpush1.xpose.msra.mxu0 0.0
    %330 = vmatprep.subr.mxu0 0.0
    %331 = vmatpush1.xpose.msra.mxu0 0.0
    %332 = vmatprep.subr.mxu0 0.0
    %333 = vmatpush1.xpose.msra.mxu0 0.0
    %334 = vmatprep.subr.mxu0 0.0
    %335 = vmatpush1.xpose.msra.mxu0 0.0
    %336 = vmatprep.subr.mxu0 0.0
    %337 = vmatpush1.xpose.msra.mxu0 0.0
    %338 = vmatprep.subr.mxu0 0.0
    %339 = vmatpush1.xpose.msra.mxu0 0.0
    %340 = vmatprep.subr.mxu0 0.0
    %341 = vmatpush1.xpose.msra.mxu0 0.0
    %342 = vmatprep.subr.mxu0 0.0
    %343 = vmatpush1.xpose.msra.mxu0 0.0
    %344 = vmatprep.subr.mxu0 0.0
    %345 = vmatpush1.xpose.msra.mxu0 0.0
    %346 = vmatprep.subr.mxu0 0.0
    %347 = vmatpush1.xpose.msra.mxu0 0.0
    %348 = vmatprep.subr.mxu0 0.0
    %349 = vmatpush1.xpose.msra.mxu0 0.0
    %350 = vmatprep.subr.mxu0 0.0
    %351 = vmatpush1.xpose.msra.mxu0 0.0
    %352 = vmatprep.subr.mxu0 0.0
    %353 = vmatpush1.xpose.msra.mxu0 0.0
    %354 = vmatprep.subr.mxu0 0.0
    %355 = vmatpush1.xpose.msra.mxu0 0.0
    %356 = vmatprep.subr.mxu0 0.0
    %357 = vmatpush1.xpose.msra.mxu0 0.0
    %358 = vmatprep.subr.mxu0 0.0
    %359 = vmatpush1.xpose.msra.mxu0 0.0
    %360 = vmatprep.subr.mxu0 0.0
    %361 = vmatpush1.xpose.msra.mxu0 0.0
    %362 = vmatprep.subr.mxu0 0.0
    %363 = vmatpush1.xpose.msra.mxu0 0.0
    %364 = vmatprep.subr.mxu0 0.0
    %365 = vmatpush1.xpose.msra.mxu0 0.0
    %366 = vmatprep.subr.mxu0 0.0
    %367 = vmatpush1.xpose.msra.mxu0 0.0
    %368 = vmatprep.subr.mxu0 0.0
    %369 = vmatpush1.xpose.msra.mxu0 0.0
    %370 = vmatprep.subr.mxu0 0.0
    %371 = vmatpush1.xpose.msra.mxu0 0.0
    %372 = vmatprep.subr.mxu0 0.0
    %373 = vmatpush1.xpose.msra.mxu0 0.0
    %374 = vmatprep.subr.mxu0 0.0
    %375 = vmatpush1.xpose.msra.mxu0 0.0
    %376 = vmatprep.subr.mxu0 0.0
    %377 = vmatpush1.xpose.msra.mxu0 0.0
    %378 = vmatprep.subr.mxu0 0.0
    %379 = vmatpush1.xpose.msra.mxu0 0.0
    %380 = vmatprep.subr.mxu0 0.0
    %381 = vmatpush1.xpose.msra.mxu0 0.0
    %382 = vmatprep.subr.mxu0 0.0
    %383 = vmatpush1.xpose.msra.mxu0 0.0
    %384 = vmatprep.mubr.f32.mxu0 0.0
    %385 = vmatmul.mubr.f32.gmra.mrb[0].mxu0 %v316
    %v386 = vpop.f32.mrb[0].mxu0
    %v387 = vadd.f32 0.0, %v386
    %v388 = vpop.f32.mrb[0].mxu0
    %389 = vdwg.mxu0
    %v390 = vmul.f32 %v387, 0.35355338
    %v391 = vadd.f32 %v390, %v311
    %v392 = vsel %vm315, %v391, -inf
    %393 = vmax.xlane.f32.xlu0 %v392
    %v394 = vpop.xlane.xlu0 %393
    %v395 = vsub.f32 %v391, %v394
    %v396 = vmul.f32 %v395, 1.442695
    %v397 = vpow.pop %v396
    %v398 = vsel %vm315, %v397, 0.0
    %399 = vadd.xlane.f32.xlu0 %v398
    %v400 = vpop.xlane.xlu0 %399
    %v401 = vrcp.pop %v400
    %v402 = vmul.f32 %v397, %v401
    %403 = vrot.lane.b32.xlu0 %v303, 64
    %v404 = vpop.permute.xlu0 %403
    %v407 = vsel %vm315, %v402, 0
    %409 = vmatprep.subr.mxu0 0.0
    %410 = vmatpush1.msra.mxu0 %v404
    %411 = vmatprep.subr.mxu0 0.0
    %412 = vmatpush1.msra.mxu0 0.0
    %413 = vmatprep.subr.mxu0 0.0
    %414 = vmatpush1.msra.mxu0 0.0
    %415 = vmatprep.subr.mxu0 0.0
    %416 = vmatpush1.msra.mxu0 0.0
    %417 = vmatprep.subr.mxu0 0.0
    %418 = vmatpush1.msra.mxu0 0.0
    %419 = vmatprep.subr.mxu0 0.0
    %420 = vmatpush1.msra.mxu0 0.0
    %421 = vmatprep.subr.mxu0 0.0
    %422 = vmatpush1.msra.mxu0 0.0
    %423 = vmatprep.subr.mxu0 0.0
    %424 = vmatpush1.msra.mxu0 0.0
    %425 = vmatprep.subr.mxu0 0.0
    %426 = vmatpush1.msra.mxu0 0.0
    %427 = vmatprep.subr.mxu0 0.0
    %428 = vmatpush1.msra.mxu0 0.0
    %429 = vmatprep.subr.mxu0 0.0
    %430 = vmatpush1.msra.mxu0 0.0
    %431 = vmatprep.subr.mxu0 0.0
    %432 = vmatpush1.msra.mxu0 0.0
    %433 = vmatprep.subr.mxu0 0.0
    %434 = vmatpush1.msra.mxu0 0.0
    %435 = vmatprep.subr.mxu0 0.0
    %436 = vmatpush1.msra.mxu0 0.0
    %437 = vmatprep.subr.mxu0 0.0
    %438 = vmatpush1.msra.mxu0 0.0
    %439 = vmatprep.subr.mxu0 0.0
    %440 = vmatpush1.msra.mxu0 0.0
    %441 = vmatprep.subr.mxu0 0.0
    %442 = vmatpush1.msra.mxu0 0.0
    %443 = vmatprep.subr.mxu0 0.0
    %444 = vmatpush1.msra.mxu0 0.0
    %445 = vmatprep.subr.mxu0 0.0
    %446 = vmatpush1.msra.mxu0 0.0
    %447 = vmatprep.subr.mxu0 0.0
    %448 = vmatpush1.msra.mxu0 0.0
    %449 = vmatprep.subr.mxu0 0.0
    %450 = vmatpush1.msra.mxu0 0.0
    %451 = vmatprep.subr.mxu0 0.0
    %452 = vmatpush1.msra.mxu0 0.0
    %453 = vmatprep.subr.mxu0 0.0
    %454 = vmatpush1.msra.mxu0 0.0
    %455 = vmatprep.subr.mxu0 0.0
    %456 = vmatpush1.msra.mxu0 0.0
    %457 = vmatprep.subr.mxu0 0.0
    %458 = vmatpush1.msra.mxu0 0.0
    %459 = vmatprep.subr.mxu0 0.0
    %460 = vmatpush1.msra.mxu0 0.0
    %461 = vmatprep.subr.mxu0 0.0
    %462 = vmatpush1.msra.mxu0 0.0
    %463 = vmatprep.subr.mxu0 0.0
    %464 = vmatpush1.msra.mxu0 0.0
    %465 = vmatprep.subr.mxu0 0.0
    %466 = vmatpush1.msra.mxu0 0.0
    %467 = vmatprep.subr.mxu0 0.0
    %468 = vmatpush1.msra.mxu0 0.0
    %469 = vmatprep.subr.mxu0 0.0
    %470 = vmatpush1.msra.mxu0 0.0
    %471 = vmatprep.subr.mxu0 0.0
    %472 = vmatpush1.msra.mxu0 0.0
    %473 = vmatprep.mubr.f32.mxu0 0.0
    %474 = vmatmul.mubr.f32.gmra.mrb[0].mxu0 %v407
    %v475 = vpop.f32.mrb[0].mxu0
    %v476 = vadd.f32 0.0, %v475
    %v477 = vpop.f32.mrb[0].mxu0
    %478 = vdwg.mxu0
    %479 = vrot.lane.b32.xlu0 %v303, 120
    %v480 = vpop.permute.xlu0 %479
    %481 = vrot.lane.b32.xlu0 %v303, 88
    %v482 = vpop.permute.xlu0 %481
    %v483 = vsel %vm315, %v480, 0
    %v485 = vsel %vm315, %v482, 0
    %487 = vmatprep.subr.mxu0 0.0
    %488 = vmatpush1.xpose.msra.mxu0 %v485
    %489 = vmatprep.subr.mxu0 0.0
    %490 = vmatpush1.xpose.msra.mxu0 0.0
    %491 = vmatprep.subr.mxu0 0.0
    %492 = vmatpush1.xpose.msra.mxu0 0.0
    %493 = vmatprep.subr.mxu0 0.0
    %494 = vmatpush1.xpose.msra.mxu0 0.0
    %495 = vmatprep.subr.mxu0 0.0
    %496 = vmatpush1.xpose.msra.mxu0 0.0
    %497 = vmatprep.subr.mxu0 0.0
    %498 = vmatpush1.xpose.msra.mxu0 0.0
    %499 = vmatprep.subr.mxu0 0.0
    %500 = vmatpush1.xpose.msra.mxu0 0.0
    %501 = vmatprep.subr.mxu0 0.0
    %502 = vmatpush1.xpose.msra.mxu0 0.0
    %503 = vmatprep.subr.mxu0 0.0
    %504 = vmatpush1.xpose.msra.mxu0 0.0
    %505 = vmatprep.subr.mxu0 0.0
    %506 = vmatpush1.xpose.msra.mxu0 0.0
    %507 = vmatprep.subr.mxu0 0.0
    %508 = vmatpush1.xpose.msra.mxu0 0.0
    %509 = vmatprep.subr.mxu0 0.0
    %510 = vmatpush1.xpose.msra.mxu0 0.0
    %511 = vmatprep.subr.mxu0 0.0
    %512 = vmatpush1.xpose.msra.mxu0 0.0
    %513 = vmatprep.subr.mxu0 0.0
    %514 = vmatpush1.xpose.msra.mxu0 0.0
    %515 = vmatprep.subr.mxu0 0.0
    %516 = vmatpush1.xpose.msra.mxu0 0.0
    %517 = vmatprep.subr.mxu0 0.0
    %518 = vmatpush1.xpose.msra.mxu0 0.0
    %519 = vmatprep.subr.mxu0 0.0
    %520 = vmatpush1.xpose.msra.mxu0 0.0
    %521 = vmatprep.subr.mxu0 0.0
    %522 = vmatpush1.xpose.msra.mxu0 0.0
    %523 = vmatprep.subr.mxu0 0.0
    %524 = vmatpush1.xpose.msra.mxu0 0.0
    %525 = vmatprep.subr.mxu0 0.0
    %526 = vmatpush1.xpose.msra.mxu0 0.0
    %527 = vmatprep.subr.mxu0 0.0
    %528 = vmatpush1.xpose.msra.mxu0 0.0
    %529 = vmatprep.subr.mxu0 0.0
    %530 = vmatpush1.xpose.msra.mxu0 0.0
    %531 = vmatprep.subr.mxu0 0.0
    %532 = vmatpush1.xpose.msra.mxu0 0.0
    %533 = vmatprep.subr.mxu0 0.0
    %534 = vmatpush1.xpose.msra.mxu0 0.0
    %535 = vmatprep.subr.mxu0 0.0
    %536 = vmatpush1.xpose.msra.mxu0 0.0
    %537 = vmatprep.subr.mxu0 0.0
    %538 = vmatpush1.xpose.msra.mxu0 0.0
    %539 = vmatprep.subr.mxu0 0.0
    %540 = vmatpush1.xpose.msra.mxu0 0.0
    %541 = vmatprep.subr.mxu0 0.0
    %542 = vmatpush1.xpose.msra.mxu0 0.0
    %543 = vmatprep.subr.mxu0 0.0
    %544 = vmatpush1.xpose.msra.mxu0 0.0
    %545 = vmatprep.subr.mxu0 0.0
    %546 = vmatpush1.xpose.msra.mxu0 0.0
    %547 = vmatprep.subr.mxu0 0.0
    %548 = vmatpush1.xpose.msra.mxu0 0.0
    %549 = vmatprep.subr.mxu0 0.0
    %550 = vmatpush1.xpose.msra.mxu0 0.0
    %551 = vmatprep.mubr.f32.mxu0 0.0
    %552 = vmatmul.mubr.f32.gmra.mrb[0].mxu0 %v483
    %v553 = vpop.f32.mrb[0].mxu0
    %v554 = vadd.f32 0.0, %v553
    %v555 = vpop.f32.mrb[0].mxu0
    %556 = vdwg.mxu0
    %v557 = vmul.f32 %v554, 0.35355338
    %v558 = vadd.f32 %v557, %v311
    %v559 = vsel %vm315, %v558, -inf
    %560 = vmax.xlane.f32.xlu0 %v559
    %v561 = vpop.xlane.xlu0 %560
    %v562 = vsub.f32 %v558, %v561
    %v563 = vmul.f32 %v562, 1.442695
    %v564 = vpow.pop %v563
    %v565 = vsel %vm315, %v564, 0.0
    %566 = vadd.xlane.f32.xlu0 %v565
    %v567 = vpop.xlane.xlu0 %566
    %v568 = vrcp.pop %v567
    %v569 = vmul.f32 %v564, %v568
    %570 = vrot.lane.b32.xlu0 %v303, 56
    %v571 = vpop.permute.xlu0 %570
    %v574 = vsel %vm315, %v569, 0
    %576 = vmatprep.subr.mxu0 0.0
    %577 = vmatpush1.msra.mxu0 %v571
    %578 = vmatprep.subr.mxu0 0.0
    %579 = vmatpush1.msra.mxu0 0.0
    %580 = vmatprep.subr.mxu0 0.0
    %581 = vmatpush1.msra.mxu0 0.0
    %582 = vmatprep.subr.mxu0 0.0
    %583 = vmatpush1.msra.mxu0 0.0
    %584 = vmatprep.subr.mxu0 0.0
    %585 = vmatpush1.msra.mxu0 0.0
    %586 = vmatprep.subr.mxu0 0.0
    %587 = vmatpush1.msra.mxu0 0.0
    %588 = vmatprep.subr.mxu0 0.0
    %589 = vmatpush1.msra.mxu0 0.0
    %590 = vmatprep.subr.mxu0 0.0
    %591 = vmatpush1.msra.mxu0 0.0
    %592 = vmatprep.subr.mxu0 0.0
    %593 = vmatpush1.msra.mxu0 0.0
    %594 = vmatprep.subr.mxu0 0.0
    %595 = vmatpush1.msra.mxu0 0.0
    %596 = vmatprep.subr.mxu0 0.0
    %597 = vmatpush1.msra.mxu0 0.0
    %598 = vmatprep.subr.mxu0 0.0
    %599 = vmatpush1.msra.mxu0 0.0
    %600 = vmatprep.subr.mxu0 0.0
    %601 = vmatpush1.msra.mxu0 0.0
    %602 = vmatprep.subr.mxu0 0.0
    %603 = vmatpush1.msra.mxu0 0.0
    %604 = vmatprep.subr.mxu0 0.0
    %605 = vmatpush1.msra.mxu0 0.0
    %606 = vmatprep.subr.mxu0 0.0
    %607 = vmatpush1.msra.mxu0 0.0
    %608 = vmatprep.subr.mxu0 0.0
    %609 = vmatpush1.msra.mxu0 0.0
    %610 = vmatprep.subr.mxu0 0.0
    %611 = vmatpush1.msra.mxu0 0.0
    %612 = vmatprep.subr.mxu0 0.0
    %613 = vmatpush1.msra.mxu0 0.0
    %614 = vmatprep.subr.mxu0 0.0
    %615 = vmatpush1.msra.mxu0 0.0
    %616 = vmatprep.subr.mxu0 0.0
    %617 = vmatpush1.msra.mxu0 0.0
    %618 = vmatprep.subr.mxu0 0.0
    %619 = vmatpush1.msra.mxu0 0.0
    %620 = vmatprep.subr.mxu0 0.0
    %621 = vmatpush1.msra.mxu0 0.0
    %622 = vmatprep.subr.mxu0 0.0
    %623 = vmatpush1.msra.mxu0 0.0
    %624 = vmatprep.subr.mxu0 0.0
    %625 = vmatpush1.msra.mxu0 0.0
    %626 = vmatprep.subr.mxu0 0.0
    %627 = vmatpush1.msra.mxu0 0.0
    %628 = vmatprep.subr.mxu0 0.0
    %629 = vmatpush1.msra.mxu0 0.0
    %630 = vmatprep.subr.mxu0 0.0
    %631 = vmatpush1.msra.mxu0 0.0
    %632 = vmatprep.subr.mxu0 0.0
    %633 = vmatpush1.msra.mxu0 0.0
    %634 = vmatprep.subr.mxu0 0.0
    %635 = vmatpush1.msra.mxu0 0.0
    %636 = vmatprep.subr.mxu0 0.0
    %637 = vmatpush1.msra.mxu0 0.0
    %638 = vmatprep.subr.mxu0 0.0
    %639 = vmatpush1.msra.mxu0 0.0
    %640 = vmatprep.mubr.f32.mxu0 0.0
    %641 = vmatmul.mubr.f32.gmra.mrb[0].mxu0 %v574
    %v642 = vpop.f32.mrb[0].mxu0
    %v643 = vadd.f32 0.0, %v642
    %v644 = vpop.f32.mrb[0].mxu0
    %645 = vdwg.mxu0
    %v647 = vsel %vm315, %v643, 0
    %649 = vmatprep.subr.mxu0 0.0
    %650 = vmatpush1.msra.mxu0 %v68
    %651 = vmatprep.subr.mxu0 0.0
    %652 = vmatpush1.msra.mxu0 0.0
    %653 = vmatprep.subr.mxu0 0.0
    %654 = vmatpush1.msra.mxu0 0.0
    %655 = vmatprep.subr.mxu0 0.0
    %656 = vmatpush1.msra.mxu0 0.0
    %657 = vmatprep.subr.mxu0 0.0
    %658 = vmatpush1.msra.mxu0 0.0
    %659 = vmatprep.subr.mxu0 0.0
    %660 = vmatpush1.msra.mxu0 0.0
    %661 = vmatprep.subr.mxu0 0.0
    %662 = vmatpush1.msra.mxu0 0.0
    %663 = vmatprep.subr.mxu0 0.0
    %664 = vmatpush1.msra.mxu0 0.0
    %665 = vmatprep.subr.mxu0 0.0
    %666 = vmatpush1.msra.mxu0 0.0
    %667 = vmatprep.subr.mxu0 0.0
    %668 = vmatpush1.msra.mxu0 0.0
    %669 = vmatprep.subr.mxu0 0.0
    %670 = vmatpush1.msra.mxu0 0.0
    %671 = vmatprep.subr.mxu0 0.0
    %672 = vmatpush1.msra.mxu0 0.0
    %673 = vmatprep.subr.mxu0 0.0
    %674 = vmatpush1.msra.mxu0 0.0
    %675 = vmatprep.subr.mxu0 0.0
    %676 = vmatpush1.msra.mxu0 0.0
    %677 = vmatprep.subr.mxu0 0.0
    %678 = vmatpush1.msra.mxu0 0.0
    %679 = vmatprep.subr.mxu0 0.0
    %680 = vmatpush1.msra.mxu0 0.0
    %681 = vmatprep.subr.mxu0 0.0
    %682 = vmatpush1.msra.mxu0 0.0
    %683 = vmatprep.subr.mxu0 0.0
    %684 = vmatpush1.msra.mxu0 0.0
    %685 = vmatprep.subr.mxu0 0.0
    %686 = vmatpush1.msra.mxu0 0.0
    %687 = vmatprep.subr.mxu0 0.0
    %688 = vmatpush1.msra.mxu0 0.0
    %689 = vmatprep.subr.mxu0 0.0
    %690 = vmatpush1.msra.mxu0 0.0
    %691 = vmatprep.subr.mxu0 0.0
    %692 = vmatpush1.msra.mxu0 0.0
    %693 = vmatprep.subr.mxu0 0.0
    %694 = vmatpush1.msra.mxu0 0.0
    %695 = vmatprep.subr.mxu0 0.0
    %696 = vmatpush1.msra.mxu0 0.0
    %697 = vmatprep.subr.mxu0 0.0
    %698 = vmatpush1.msra.mxu0 0.0
    %699 = vmatprep.subr.mxu0 0.0
    %700 = vmatpush1.msra.mxu0 0.0
    %701 = vmatprep.subr.mxu0 0.0
    %702 = vmatpush1.msra.mxu0 0.0
    %703 = vmatprep.subr.mxu0 0.0
    %704 = vmatpush1.msra.mxu0 0.0
    %705 = vmatprep.subr.mxu0 0.0
    %706 = vmatpush1.msra.mxu0 0.0
    %707 = vmatprep.subr.mxu0 0.0
    %708 = vmatpush1.msra.mxu0 0.0
    %709 = vmatprep.subr.mxu0 0.0
    %710 = vmatpush1.msra.mxu0 0.0
    %711 = vmatprep.subr.mxu0 0.0
    %712 = vmatpush1.msra.mxu0 0.0
    %713 = vmatprep.mubr.f32.mxu0 0.0
    %714 = vmatmul.mubr.f32.gmra.mrb[0].mxu0 %v647
    %v715 = vpop.f32.mrb[0].mxu0
    %v716 = vadd.f32 0.0, %v715
    %v717 = vpop.f32.mrb[0].mxu0
    %718 = vdwg.mxu0
    %v720 = vsel %vm315, %v476, 0
    %722 = vmatprep.subr.mxu0 0.0
    %723 = vmatpush1.msra.mxu0 %v67
    %724 = vmatprep.subr.mxu0 0.0
    %725 = vmatpush1.msra.mxu0 0.0
    %726 = vmatprep.subr.mxu0 0.0
    %727 = vmatpush1.msra.mxu0 0.0
    %728 = vmatprep.subr.mxu0 0.0
    %729 = vmatpush1.msra.mxu0 0.0
    %730 = vmatprep.subr.mxu0 0.0
    %731 = vmatpush1.msra.mxu0 0.0
    %732 = vmatprep.subr.mxu0 0.0
    %733 = vmatpush1.msra.mxu0 0.0
    %734 = vmatprep.subr.mxu0 0.0
    %735 = vmatpush1.msra.mxu0 0.0
    %736 = vmatprep.subr.mxu0 0.0
    %737 = vmatpush1.msra.mxu0 0.0
    %738 = vmatprep.subr.mxu0 0.0
    %739 = vmatpush1.msra.mxu0 0.0
    %740 = vmatprep.subr.mxu0 0.0
    %741 = vmatpush1.msra.mxu0 0.0
    %742 = vmatprep.subr.mxu0 0.0
    %743 = vmatpush1.msra.mxu0 0.0
    %744 = vmatprep.subr.mxu0 0.0
    %745 = vmatpush1.msra.mxu0 0.0
    %746 = vmatprep.subr.mxu0 0.0
    %747 = vmatpush1.msra.mxu0 0.0
    %748 = vmatprep.subr.mxu0 0.0
    %749 = vmatpush1.msra.mxu0 0.0
    %750 = vmatprep.subr.mxu0 0.0
    %751 = vmatpush1.msra.mxu0 0.0
    %752 = vmatprep.subr.mxu0 0.0
    %753 = vmatpush1.msra.mxu0 0.0
    %754 = vmatprep.subr.mxu0 0.0
    %755 = vmatpush1.msra.mxu0 0.0
    %756 = vmatprep.subr.mxu0 0.0
    %757 = vmatpush1.msra.mxu0 0.0
    %758 = vmatprep.subr.mxu0 0.0
    %759 = vmatpush1.msra.mxu0 0.0
    %760 = vmatprep.subr.mxu0 0.0
    %761 = vmatpush1.msra.mxu0 0.0
    %762 = vmatprep.subr.mxu0 0.0
    %763 = vmatpush1.msra.mxu0 0.0
    %764 = vmatprep.subr.mxu0 0.0
    %765 = vmatpush1.msra.mxu0 0.0
    %766 = vmatprep.subr.mxu0 0.0
    %767 = vmatpush1.msra.mxu0 0.0
    %768 = vmatprep.subr.mxu0 0.0
    %769 = vmatpush1.msra.mxu0 0.0
    %770 = vmatprep.subr.mxu0 0.0
    %771 = vmatpush1.msra.mxu0 0.0
    %772 = vmatprep.subr.mxu0 0.0
    %773 = vmatpush1.msra.mxu0 0.0
    %774 = vmatprep.subr.mxu0 0.0
    %775 = vmatpush1.msra.mxu0 0.0
    %776 = vmatprep.subr.mxu0 0.0
    %777 = vmatpush1.msra.mxu0 0.0
    %778 = vmatprep.subr.mxu0 0.0
    %779 = vmatpush1.msra.mxu0 0.0
    %780 = vmatprep.subr.mxu0 0.0
    %781 = vmatpush1.msra.mxu0 0.0
    %782 = vmatprep.subr.mxu0 0.0
    %783 = vmatpush1.msra.mxu0 0.0
    %784 = vmatprep.subr.mxu0 0.0
    %785 = vmatpush1.msra.mxu0 0.0
    %786 = vmatprep.mubr.f32.mxu0 0.0
    %787 = vmatmul.mubr.f32.gmra.mrb[0].mxu0 %v720
    %v788 = vpop.f32.mrb[0].mxu0
    %v789 = vadd.f32 %v716, %v788
    %v790 = vpop.f32.mrb[0].mxu0
    %791 = vdwg.mxu0
    %792 = vrot.lane.b32.xlu0 %v303, 112
    %v793 = vpop.permute.xlu0 %792
    %794 = vrot.lane.b32.xlu0 %v303, 80
    %v795 = vpop.permute.xlu0 %794
    %v796 = vsel %vm315, %v793, 0
    %v798 = vsel %vm315, %v795, 0
    %800 = vmatprep.subr.mxu0 0.0
    %801 = vmatpush1.xpose.msra.mxu0 %v798
    %802 = vmatprep.subr.mxu0 0.0
    %803 = vmatpush1.xpose.msra.mxu0 0.0
    %804 = vmatprep.subr.mxu0 0.0
    %805 = vmatpush1.xpose.msra.mxu0 0.0
    %806 = vmatprep.subr.mxu0 0.0
    %807 = vmatpush1.xpose.msra.mxu0 0.0
    %808 = vmatprep.subr.mxu0 0.0
    %809 = vmatpush1.xpose.msra.mxu0 0.0
    %810 = vmatprep.subr.mxu0 0.0
    %811 = vmatpush1.xpose.msra.mxu0 0.0
    %812 = vmatprep.subr.mxu0 0.0
    %813 = vmatpush1.xpose.msra.mxu0 0.0
    %814 = vmatprep.subr.mxu0 0.0
    %815 = vmatpush1.xpose.msra.mxu0 0.0
    %816 = vmatprep.subr.mxu0 0.0
    %817 = vmatpush1.xpose.msra.mxu0 0.0
    %818 = vmatprep.subr.mxu0 0.0
    %819 = vmatpush1.xpose.msra.mxu0 0.0
    %820 = vmatprep.subr.mxu0 0.0
    %821 = vmatpush1.xpose.msra.mxu0 0.0
    %822 = vmatprep.subr.mxu0 0.0
    %823 = vmatpush1.xpose.msra.mxu0 0.0
    %824 = vmatprep.subr.mxu0 0.0
    %825 = vmatpush1.xpose.msra.mxu0 0.0
    %826 = vmatprep.subr.mxu0 0.0
    %827 = vmatpush1.xpose.msra.mxu0 0.0
    %828 = vmatprep.subr.mxu0 0.0
    %829 = vmatpush1.xpose.msra.mxu0 0.0
    %830 = vmatprep.subr.mxu0 0.0
    %831 = vmatpush1.xpose.msra.mxu0 0.0
    %832 = vmatprep.subr.mxu0 0.0
    %833 = vmatpush1.xpose.msra.mxu0 0.0
    %834 = vmatprep.subr.mxu0 0.0
    %835 = vmatpush1.xpose.msra.mxu0 0.0
    %836 = vmatprep.subr.mxu0 0.0
    %837 = vmatpush1.xpose.msra.mxu0 0.0
    %838 = vmatprep.subr.mxu0 0.0
    %839 = vmatpush1.xpose.msra.mxu0 0.0
    %840 = vmatprep.subr.mxu0 0.0
    %841 = vmatpush1.xpose.msra.mxu0 0.0
    %842 = vmatprep.subr.mxu0 0.0
    %843 = vmatpush1.xpose.msra.mxu0 0.0
    %844 = vmatprep.subr.mxu0 0.0
    %845 = vmatpush1.xpose.msra.mxu0 0.0
    %846 = vmatprep.subr.mxu0 0.0
    %847 = vmatpush1.xpose.msra.mxu0 0.0
    %848 = vmatprep.subr.mxu0 0.0
    %849 = vmatpush1.xpose.msra.mxu0 0.0
    %850 = vmatprep.subr.mxu0 0.0
    %851 = vmatpush1.xpose.msra.mxu0 0.0
    %852 = vmatprep.subr.mxu0 0.0
    %853 = vmatpush1.xpose.msra.mxu0 0.0
    %854 = vmatprep.subr.mxu0 0.0
    %855 = vmatpush1.xpose.msra.mxu0 0.0
    %856 = vmatprep.subr.mxu0 0.0
    %857 = vmatpush1.xpose.msra.mxu0 0.0
    %858 = vmatprep.subr.mxu0 0.0
    %859 = vmatpush1.xpose.msra.mxu0 0.0
    %860 = vmatprep.subr.mxu0 0.0
    %861 = vmatpush1.xpose.msra.mxu0 0.0
    %862 = vmatprep.subr.mxu0 0.0
    %863 = vmatpush1.xpose.msra.mxu0 0.0
    %864 = vmatprep.mubr.f32.mxu0 0.0
    %865 = vmatmul.mubr.f32.gmra.mrb[0].mxu0 %v796
    %v866 = vpop.f32.mrb[0].mxu0
    %v867 = vadd.f32 0.0, %v866
    %v868 = vpop.f32.mrb[0].mxu0
    %869 = vdwg.mxu0
    %v870 = vmul.f32 %v867, 0.35355338
    %v871 = vadd.f32 %v870, %v311
    %v872 = vsel %vm315, %v871, -inf
    %873 = vmax.xlane.f32.xlu0 %v872
    %v874 = vpop.xlane.xlu0 %873
    %v875 = vsub.f32 %v871, %v874
    %v876 = vmul.f32 %v875, 1.442695
    %v877 = vpow.pop %v876
    %v878 = vsel %vm315, %v877, 0.0
    %879 = vadd.xlane.f32.xlu0 %v878
    %v880 = vpop.xlane.xlu0 %879
    %v881 = vrcp.pop %v880
    %v882 = vmul.f32 %v877, %v881
    %883 = vrot.lane.b32.xlu0 %v303, 48
    %v884 = vpop.permute.xlu0 %883
    %v887 = vsel %vm315, %v882, 0
    %889 = vmatprep.subr.mxu0 0.0
    %890 = vmatpush1.msra.mxu0 %v884
    %891 = vmatprep.subr.mxu0 0.0
    %892 = vmatpush1.msra.mxu0 0.0
    %893 = vmatprep.subr.mxu0 0.0
    %894 = vmatpush1.msra.mxu0 0.0
    %895 = vmatprep.subr.mxu0 0.0
    %896 = vmatpush1.msra.mxu0 0.0
    %897 = vmatprep.subr.mxu0 0.0
    %898 = vmatpush1.msra.mxu0 0.0
    %899 = vmatprep.subr.mxu0 0.0
    %900 = vmatpush1.msra.mxu0 0.0
    %901 = vmatprep.subr.mxu0 0.0
    %902 = vmatpush1.msra.mxu0 0.0
    %903 = vmatprep.subr.mxu0 0.0
    %904 = vmatpush1.msra.mxu0 0.0
    %905 = vmatprep.subr.mxu0 0.0
    %906 = vmatpush1.msra.mxu0 0.0
    %907 = vmatprep.subr.mxu0 0.0
    %908 = vmatpush1.msra.mxu0 0.0
    %909 = vmatprep.subr.mxu0 0.0
    %910 = vmatpush1.msra.mxu0 0.0
    %911 = vmatprep.subr.mxu0 0.0
    %912 = vmatpush1.msra.mxu0 0.0
    %913 = vmatprep.subr.mxu0 0.0
    %914 = vmatpush1.msra.mxu0 0.0
    %915 = vmatprep.subr.mxu0 0.0
    %916 = vmatpush1.msra.mxu0 0.0
    %917 = vmatprep.subr.mxu0 0.0
    %918 = vmatpush1.msra.mxu0 0.0
    %919 = vmatprep.subr.mxu0 0.0
    %920 = vmatpush1.msra.mxu0 0.0
    %921 = vmatprep.subr.mxu0 0.0
    %922 = vmatpush1.msra.mxu0 0.0
    %923 = vmatprep.subr.mxu0 0.0
    %924 = vmatpush1.msra.mxu0 0.0
    %925 = vmatprep.subr.mxu0 0.0
    %926 = vmatpush1.msra.mxu0 0.0
    %927 = vmatprep.subr.mxu0 0.0
    %928 = vmatpush1.msra.mxu0 0.0
    %929 = vmatprep.subr.mxu0 0.0
    %930 = vmatpush1.msra.mxu0 0.0
    %931 = vmatprep.subr.mxu0 0.0
    %932 = vmatpush1.msra.mxu0 0.0
    %933 = vmatprep.subr.mxu0 0.0
    %934 = vmatpush1.msra.mxu0 0.0
    %935 = vmatprep.subr.mxu0 0.0
    %936 = vmatpush1.msra.mxu0 0.0
    %937 = vmatprep.subr.mxu0 0.0
    %938 = vmatpush1.msra.mxu0 0.0
    %939 = vmatprep.subr.mxu0 0.0
    %940 = vmatpush1.msra.mxu0 0.0
    %941 = vmatprep.subr.mxu0 0.0
    %942 = vmatpush1.msra.mxu0 0.0
    %943 = vmatprep.subr.mxu0 0.0
    %944 = vmatpush1.msra.mxu0 0.0
    %945 = vmatprep.subr.mxu0 0.0
    %946 = vmatpush1.msra.mxu0 0.0
    %947 = vmatprep.subr.mxu0 0.0
    %948 = vmatpush1.msra.mxu0 0.0
    %949 = vmatprep.subr.mxu0 0.0
    %950 = vmatpush1.msra.mxu0 0.0
    %951 = vmatprep.subr.mxu0 0.0
    %952 = vmatpush1.msra.mxu0 0.0
    %953 = vmatprep.mubr.f32.mxu0 0.0
    %954 = vmatmul.mubr.f32.gmra.mrb[0].mxu0 %v887
    %v955 = vpop.f32.mrb[0].mxu0
    %v956 = vadd.f32 0.0, %v955
    %v957 = vpop.f32.mrb[0].mxu0
    %958 = vdwg.mxu0
    %v960 = vsel %vm315, %v956, 0
    %962 = vmatprep.subr.mxu0 0.0
    %963 = vmatpush1.msra.mxu0 %v69
    %964 = vmatprep.subr.mxu0 0.0
    %965 = vmatpush1.msra.mxu0 0.0
    %966 = vmatprep.subr.mxu0 0.0
    %967 = vmatpush1.msra.mxu0 0.0
    %968 = vmatprep.subr.mxu0 0.0
    %969 = vmatpush1.msra.mxu0 0.0
    %970 = vmatprep.subr.mxu0 0.0
    %971 = vmatpush1.msra.mxu0 0.0
    %972 = vmatprep.subr.mxu0 0.0
    %973 = vmatpush1.msra.mxu0 0.0
    %974 = vmatprep.subr.mxu0 0.0
    %975 = vmatpush1.msra.mxu0 0.0
    %976 = vmatprep.subr.mxu0 0.0
    %977 = vmatpush1.msra.mxu0 0.0
    %978 = vmatprep.subr.mxu0 0.0
    %979 = vmatpush1.msra.mxu0 0.0
    %980 = vmatprep.subr.mxu0 0.0
    %981 = vmatpush1.msra.mxu0 0.0
    %982 = vmatprep.subr.mxu0 0.0
    %983 = vmatpush1.msra.mxu0 0.0
    %984 = vmatprep.subr.mxu0 0.0
    %985 = vmatpush1.msra.mxu0 0.0
    %986 = vmatprep.subr.mxu0 0.0
    %987 = vmatpush1.msra.mxu0 0.0
    %988 = vmatprep.subr.mxu0 0.0
    %989 = vmatpush1.msra.mxu0 0.0
    %990 = vmatprep.subr.mxu0 0.0
    %991 = vmatpush1.msra.mxu0 0.0
    %992 = vmatprep.subr.mxu0 0.0
    %993 = vmatpush1.msra.mxu0 0.0
    %994 = vmatprep.subr.mxu0 0.0
    %995 = vmatpush1.msra.mxu0 0.0
    %996 = vmatprep.subr.mxu0 0.0
    %997 = vmatpush1.msra.mxu0 0.0
    %998 = vmatprep.subr.mxu0 0.0
    %999 = vmatpush1.msra.mxu0 0.0
    %1000 = vmatprep.subr.mxu0 0.0
    %1001 = vmatpush1.msra.mxu0 0.0
    %1002 = vmatprep.subr.mxu0 0.0
    %1003 = vmatpush1.msra.mxu0 0.0
    %1004 = vmatprep.subr.mxu0 0.0
    %1005 = vmatpush1.msra.mxu0 0.0
    %1006 = vmatprep.subr.mxu0 0.0
    %1007 = vmatpush1.msra.mxu0 0.0
    %1008 = vmatprep.subr.mxu0 0.0
    %1009 = vmatpush1.msra.mxu0 0.0
    %1010 = vmatprep.subr.mxu0 0.0
    %1011 = vmatpush1.msra.mxu0 0.0
    %1012 = vmatprep.subr.mxu0 0.0
    %1013 = vmatpush1.msra.mxu0 0.0
    %1014 = vmatprep.subr.mxu0 0.0
    %1015 = vmatpush1.msra.mxu0 0.0
    %1016 = vmatprep.subr.mxu0 0.0
    %1017 = vmatpush1.msra.mxu0 0.0
    %1018 = vmatprep.subr.mxu0 0.0
    %1019 = vmatpush1.msra.mxu0 0.0
    %1020 = vmatprep.subr.mxu0 0.0
    %1021 = vmatpush1.msra.mxu0 0.0
    %1022 = vmatprep.subr.mxu0 0.0
    %1023 = vmatpush1.msra.mxu0 0.0
    %1024 = vmatprep.subr.mxu0 0.0
    %1025 = vmatpush1.msra.mxu0 0.0
    %1026 = vmatprep.mubr.f32.mxu0 0.0
    %1027 = vmatmul.mubr.f32.gmra.mrb[0].mxu0 %v960
    %v1028 = vpop.f32.mrb[0].mxu0
    %v1029 = vadd.f32 0.0, %v1028
    %v1030 = vpop.f32.mrb[0].mxu0
    %1031 = vdwg.mxu0
    %v1032 = vadd.f32 %v789, %v1029
    %1033 = vrot.lane.b32.xlu0 %v303, 104
    %v1034 = vpop.permute.xlu0 %1033
    %1035 = vrot.lane.b32.xlu0 %v303, 72
    %v1036 = vpop.permute.xlu0 %1035
    %v1037 = vsel %vm315, %v1034, 0
    %v1039 = vsel %vm315, %v1036, 0
    %1041 = vmatprep.subr.mxu0 0.0
    %1042 = vmatpush1.xpose.msra.mxu0 %v1039
    %1043 = vmatprep.subr.mxu0 0.0
    %1044 = vmatpush1.xpose.msra.mxu0 0.0
    %1045 = vmatprep.subr.mxu0 0.0
    %1046 = vmatpush1.xpose.msra.mxu0 0.0
    %1047 = vmatprep.subr.mxu0 0.0
    %1048 = vmatpush1.xpose.msra.mxu0 0.0
    %1049 = vmatprep.subr.mxu0 0.0
    %1050 = vmatpush1.xpose.msra.mxu0 0.0
    %1051 = vmatprep.subr.mxu0 0.0
    %1052 = vmatpush1.xpose.msra.mxu0 0.0
    %1053 = vmatprep.subr.mxu0 0.0
    %1054 = vmatpush1.xpose.msra.mxu0 0.0
    %1055 = vmatprep.subr.mxu0 0.0
    %1056 = vmatpush1.xpose.msra.mxu0 0.0
    %1057 = vmatprep.subr.mxu0 0.0
    %1058 = vmatpush1.xpose.msra.mxu0 0.0
    %1059 = vmatprep.subr.mxu0 0.0
    %1060 = vmatpush1.xpose.msra.mxu0 0.0
    %1061 = vmatprep.subr.mxu0 0.0
    %1062 = vmatpush1.xpose.msra.mxu0 0.0
    %1063 = vmatprep.subr.mxu0 0.0
    %1064 = vmatpush1.xpose.msra.mxu0 0.0
    %1065 = vmatprep.subr.mxu0 0.0
    %1066 = vmatpush1.xpose.msra.mxu0 0.0
    %1067 = vmatprep.subr.mxu0 0.0
    %1068 = vmatpush1.xpose.msra.mxu0 0.0
    %1069 = vmatprep.subr.mxu0 0.0
    %1070 = vmatpush1.xpose.msra.mxu0 0.0
    %1071 = vmatprep.subr.mxu0 0.0
    %1072 = vmatpush1.xpose.msra.mxu0 0.0
    %1073 = vmatprep.subr.mxu0 0.0
    %1074 = vmatpush1.xpose.msra.mxu0 0.0
    %1075 = vmatprep.subr.mxu0 0.0
    %1076 = vmatpush1.xpose.msra.mxu0 0.0
    %1077 = vmatprep.subr.mxu0 0.0
    %1078 = vmatpush1.xpose.msra.mxu0 0.0
    %1079 = vmatprep.subr.mxu0 0.0
    %1080 = vmatpush1.xpose.msra.mxu0 0.0
    %1081 = vmatprep.subr.mxu0 0.0
    %1082 = vmatpush1.xpose.msra.mxu0 0.0
    %1083 = vmatprep.subr.mxu0 0.0
    %1084 = vmatpush1.xpose.msra.mxu0 0.0
    %1085 = vmatprep.subr.mxu0 0.0
    %1086 = vmatpush1.xpose.msra.mxu0 0.0
    %1087 = vmatprep.subr.mxu0 0.0
    %1088 = vmatpush1.xpose.msra.mxu0 0.0
    %1089 = vmatprep.subr.mxu0 0.0
    %1090 = vmatpush1.xpose.msra.mxu0 0.0
    %1091 = vmatprep.subr.mxu0 0.0
    %1092 = vmatpush1.xpose.msra.mxu0 0.0
    %1093 = vmatprep.subr.mxu0 0.0
    %1094 = vmatpush1.xpose.msra.mxu0 0.0
    %1095 = vmatprep.subr.mxu0 0.0
    %1096 = vmatpush1.xpose.msra.mxu0 0.0
    %1097 = vmatprep.subr.mxu0 0.0
    %1098 = vmatpush1.xpose.msra.mxu0 0.0
    %1099 = vmatprep.subr.mxu0 0.0
    %1100 = vmatpush1.xpose.msra.mxu0 0.0
    %1101 = vmatprep.subr.mxu0 0.0
    %1102 = vmatpush1.xpose.msra.mxu0 0.0
    %1103 = vmatprep.subr.mxu0 0.0
    %1104 = vmatpush1.xpose.msra.mxu0 0.0
    %1105 = vmatprep.mubr.f32.mxu0 0.0
    %1106 = vmatmul.mubr.f32.gmra.mrb[0].mxu0 %v1037
    %v1107 = vpop.f32.mrb[0].mxu0
    %v1108 = vadd.f32 0.0, %v1107
    %v1109 = vpop.f32.mrb[0].mxu0
    %1110 = vdwg.mxu0
    %v1111 = vmul.f32 %v1108, 0.35355338
    %v1112 = vadd.f32 %v1111, %v311
    %v1113 = vsel %vm315, %v1112, -inf
    %1114 = vmax.xlane.f32.xlu0 %v1113
    %v1115 = vpop.xlane.xlu0 %1114
    %v1116 = vsub.f32 %v1112, %v1115
    %v1117 = vmul.f32 %v1116, 1.442695
    %v1118 = vpow.pop %v1117
    %v1119 = vsel %vm315, %v1118, 0.0
    %1120 = vadd.xlane.f32.xlu0 %v1119
    %v1121 = vpop.xlane.xlu0 %1120
    %v1122 = vrcp.pop %v1121
    %v1123 = vmul.f32 %v1118, %v1122
    %1124 = vrot.lane.b32.xlu0 %v303, 40
    %v1125 = vpop.permute.xlu0 %1124
    %v1128 = vsel %vm315, %v1123, 0
    %1130 = vmatprep.subr.mxu0 0.0
    %1131 = vmatpush1.msra.mxu0 %v1125
    %1132 = vmatprep.subr.mxu0 0.0
    %1133 = vmatpush1.msra.mxu0 0.0
    %1134 = vmatprep.subr.mxu0 0.0
    %1135 = vmatpush1.msra.mxu0 0.0
    %1136 = vmatprep.subr.mxu0 0.0
    %1137 = vmatpush1.msra.mxu0 0.0
    %1138 = vmatprep.subr.mxu0 0.0
    %1139 = vmatpush1.msra.mxu0 0.0
    %1140 = vmatprep.subr.mxu0 0.0
    %1141 = vmatpush1.msra.mxu0 0.0
    %1142 = vmatprep.subr.mxu0 0.0
    %1143 = vmatpush1.msra.mxu0 0.0
    %1144 = vmatprep.subr.mxu0 0.0
    %1145 = vmatpush1.msra.mxu0 0.0
    %1146 = vmatprep.subr.mxu0 0.0
    %1147 = vmatpush1.msra.mxu0 0.0
    %1148 = vmatprep.subr.mxu0 0.0
    %1149 = vmatpush1.msra.mxu0 0.0
    %1150 = vmatprep.subr.mxu0 0.0
    %1151 = vmatpush1.msra.mxu0 0.0
    %1152 = vmatprep.subr.mxu0 0.0
    %1153 = vmatpush1.msra.mxu0 0.0
    %1154 = vmatprep.subr.mxu0 0.0
    %1155 = vmatpush1.msra.mxu0 0.0
    %1156 = vmatprep.subr.mxu0 0.0
    %1157 = vmatpush1.msra.mxu0 0.0
    %1158 = vmatprep.subr.mxu0 0.0
    %1159 = vmatpush1.msra.mxu0 0.0
    %1160 = vmatprep.subr.mxu0 0.0
    %1161 = vmatpush1.msra.mxu0 0.0
    %1162 = vmatprep.subr.mxu0 0.0
    %1163 = vmatpush1.msra.mxu0 0.0
    %1164 = vmatprep.subr.mxu0 0.0
    %1165 = vmatpush1.msra.mxu0 0.0
    %1166 = vmatprep.subr.mxu0 0.0
    %1167 = vmatpush1.msra.mxu0 0.0
    %1168 = vmatprep.subr.mxu0 0.0
    %1169 = vmatpush1.msra.mxu0 0.0
    %1170 = vmatprep.subr.mxu0 0.0
    %1171 = vmatpush1.msra.mxu0 0.0
    %1172 = vmatprep.subr.mxu0 0.0
    %1173 = vmatpush1.msra.mxu0 0.0
    %1174 = vmatprep.subr.mxu0 0.0
    %1175 = vmatpush1.msra.mxu0 0.0
    %1176 = vmatprep.subr.mxu0 0.0
    %1177 = vmatpush1.msra.mxu0 0.0
    %1178 = vmatprep.subr.mxu0 0.0
    %1179 = vmatpush1.msra.mxu0 0.0
    %1180 = vmatprep.subr.mxu0 0.0
    %1181 = vmatpush1.msra.mxu0 0.0
    %1182 = vmatprep.subr.mxu0 0.0
    %1183 = vmatpush1.msra.mxu0 0.0
    %1184 = vmatprep.subr.mxu0 0.0
    %1185 = vmatpush1.msra.mxu0 0.0
    %1186 = vmatprep.subr.mxu0 0.0
    %1187 = vmatpush1.msra.mxu0 0.0
    %1188 = vmatprep.subr.mxu0 0.0
    %1189 = vmatpush1.msra.mxu0 0.0
    %1190 = vmatprep.subr.mxu0 0.0
    %1191 = vmatpush1.msra.mxu0 0.0
    %1192 = vmatprep.subr.mxu0 0.0
    %1193 = vmatpush1.msra.mxu0 0.0
    %1194 = vmatprep.mubr.f32.mxu0 0.0
    %1195 = vmatmul.mubr.f32.gmra.mrb[0].mxu0 %v1128
    %v1196 = vpop.f32.mrb[0].mxu0
    %v1197 = vadd.f32 0.0, %v1196
    %v1198 = vpop.f32.mrb[0].mxu0
    %1199 = vdwg.mxu0
    %v1201 = vsel %vm315, %v1197, 0
    %1203 = vmatprep.subr.mxu0 0.0
    %1204 = vmatpush1.msra.mxu0 %v70
    %1205 = vmatprep.subr.mxu0 0.0
    %1206 = vmatpush1.msra.mxu0 0.0
    %1207 = vmatprep.subr.mxu0 0.0
    %1208 = vmatpush1.msra.mxu0 0.0
    %1209 = vmatprep.subr.mxu0 0.0
    %1210 = vmatpush1.msra.mxu0 0.0
    %1211 = vmatprep.subr.mxu0 0.0
    %1212 = vmatpush1.msra.mxu0 0.0
    %1213 = vmatprep.subr.mxu0 0.0
    %1214 = vmatpush1.msra.mxu0 0.0
    %1215 = vmatprep.subr.mxu0 0.0
    %1216 = vmatpush1.msra.mxu0 0.0
    %1217 = vmatprep.subr.mxu0 0.0
    %1218 = vmatpush1.msra.mxu0 0.0
    %1219 = vmatprep.subr.mxu0 0.0
    %1220 = vmatpush1.msra.mxu0 0.0
    %1221 = vmatprep.subr.mxu0 0.0
    %1222 = vmatpush1.msra.mxu0 0.0
    %1223 = vmatprep.subr.mxu0 0.0
    %1224 = vmatpush1.msra.mxu0 0.0
    %1225 = vmatprep.subr.mxu0 0.0
    %1226 = vmatpush1.msra.mxu0 0.0
    %1227 = vmatprep.subr.mxu0 0.0
    %1228 = vmatpush1.msra.mxu0 0.0
    %1229 = vmatprep.subr.mxu0 0.0
    %1230 = vmatpush1.msra.mxu0 0.0
    %1231 = vmatprep.subr.mxu0 0.0
    %1232 = vmatpush1.msra.mxu0 0.0
    %1233 = vmatprep.subr.mxu0 0.0
    %1234 = vmatpush1.msra.mxu0 0.0
    %1235 = vmatprep.subr.mxu0 0.0
    %1236 = vmatpush1.msra.mxu0 0.0
    %1237 = vmatprep.subr.mxu0 0.0
    %1238 = vmatpush1.msra.mxu0 0.0
    %1239 = vmatprep.subr.mxu0 0.0
    %1240 = vmatpush1.msra.mxu0 0.0
    %1241 = vmatprep.subr.mxu0 0.0
    %1242 = vmatpush1.msra.mxu0 0.0
    %1243 = vmatprep.subr.mxu0 0.0
    %1244 = vmatpush1.msra.mxu0 0.0
    %1245 = vmatprep.subr.mxu0 0.0
    %1246 = vmatpush1.msra.mxu0 0.0
    %1247 = vmatprep.subr.mxu0 0.0
    %1248 = vmatpush1.msra.mxu0 0.0
    %1249 = vmatprep.subr.mxu0 0.0
    %1250 = vmatpush1.msra.mxu0 0.0
    %1251 = vmatprep.subr.mxu0 0.0
    %1252 = vmatpush1.msra.mxu0 0.0
    %1253 = vmatprep.subr.mxu0 0.0
    %1254 = vmatpush1.msra.mxu0 0.0
    %1255 = vmatprep.subr.mxu0 0.0
    %1256 = vmatpush1.msra.mxu0 0.0
    %1257 = vmatprep.subr.mxu0 0.0
    %1258 = vmatpush1.msra.mxu0 0.0
    %1259 = vmatprep.subr.mxu0 0.0
    %1260 = vmatpush1.msra.mxu0 0.0
    %1261 = vmatprep.subr.mxu0 0.0
    %1262 = vmatpush1.msra.mxu0 0.0
    %1263 = vmatprep.subr.mxu0 0.0
    %1264 = vmatpush1.msra.mxu0 0.0
    %1265 = vmatprep.subr.mxu0 0.0
    %1266 = vmatpush1.msra.mxu0 0.0
    %1267 = vmatprep.mubr.f32.mxu0 0.0
    %1268 = vmatmul.mubr.f32.gmra.mrb[0].mxu0 %v1201
    %v1269 = vpop.f32.mrb[0].mxu0
    %v1270 = vadd.f32 0.0, %v1269
    %v1271 = vpop.f32.mrb[0].mxu0
    %1272 = vdwg.mxu0
    %v1273 = vadd.f32 %v1032, %v1270
    %v1274 = vlaneseq
    %v1275 = vshrl.u32 %v1274, 7
    %v1276 = vsub.s32 6, %v1275
    %v1277 = vrot.slane %v57, %v1276
    %v1278 = vadd.f32 %v1273, %v1277
    %v1279 = vmul.f32 %v228, 2.0
    %v1280 = vadd.f32 %v1279, %v1278
    %v1281 = vsel %vm99, %v1280, 0.0
    %1282 = vadd.xlane.f32.xlu0 %v1281
    %v1283 = vpop.xlane.xlu0 %1282
    %v1284 = vmul.f32 %v1283, %v208
    %v1285 = vsub.f32 %v1280, %v1284
    %v1286 = vmul.f32 %v1285, %v1285
    %v1287 = vsel %vm99, %v1286, 0.0
    %1288 = vadd.xlane.f32.xlu0 %v1287
    %v1289 = vpop.xlane.xlu0 %1288
    %v1290 = vmul.f32 %v1289, %v208
    %v1291 = vadd.f32 %v1290, 1e-05
    %v1292 = vrsqrt.pop %v1291
    %v1293 = vmul.f32 %v1285, %v1292
    %v1294 = vlaneseq
    %v1295 = vshrl.u32 %v1294, 7
    %v1296 = vsub.s32 7, %v1295
    %v1297 = vrot.slane %v57, %v1296
    %v1298 = vmul.f32 %v1293, %v1297
    %v1299 = vlaneseq
    %v1300 = vshrl.u32 %v1299, 7
    %v1301 = vsub.s32 0, %v1300
    %v1302 = vrot.slane %v58, %v1301
    %v1303 = vadd.f32 %v1298, %v1302
    %v1304 = vlaneseq
    %v1305 = vshrl.u32 %v1304, 7
    %v1306 = vsub.s32 1, %v1305
    %v1307 = vrot.slane %v58, %v1306
    %v1309 = vsel %vm99, %v1303, 0
    %1311 = vmatprep.subr.mxu0 0.0
    %1312 = vmatpush1.msra.mxu0 %v71
    %1313 = vmatprep.subr.mxu0 0.0
    %1314 = vmatpush1.msra.mxu0 %v72
    %1315 = vmatprep.subr.mxu0 0.0
    %1316 = vmatpush1.msra.mxu0 %v73
    %1317 = vmatprep.subr.mxu0 0.0
    %1318 = vmatpush1.msra.mxu0 %v74
    %1319 = vmatprep.subr.mxu0 0.0
    %1320 = vmatpush1.msra.mxu0 0.0
    %1321 = vmatprep.subr.mxu0 0.0
    %1322 = vmatpush1.msra.mxu0 0.0
    %1323 = vmatprep.subr.mxu0 0.0
    %1324 = vmatpush1.msra.mxu0 0.0
    %1325 = vmatprep.subr.mxu0 0.0
    %1326 = vmatpush1.msra.mxu0 0.0
    %1327 = vmatprep.subr.mxu0 0.0
    %1328 = vmatpush1.msra.mxu0 0.0
    %1329 = vmatprep.subr.mxu0 0.0
    %1330 = vmatpush1.msra.mxu0 0.0
    %1331 = vmatprep.subr.mxu0 0.0
    %1332 = vmatpush1.msra.mxu0 0.0
    %1333 = vmatprep.subr.mxu0 0.0
    %1334 = vmatpush1.msra.mxu0 0.0
    %1335 = vmatprep.subr.mxu0 0.0
    %1336 = vmatpush1.msra.mxu0 0.0
    %1337 = vmatprep.subr.mxu0 0.0
    %1338 = vmatpush1.msra.mxu0 0.0
    %1339 = vmatprep.subr.mxu0 0.0
    %1340 = vmatpush1.msra.mxu0 0.0
    %1341 = vmatprep.subr.mxu0 0.0
    %1342 = vmatpush1.msra.mxu0 0.0
    %1343 = vmatprep.subr.mxu0 0.0
    %1344 = vmatpush1.msra.mxu0 0.0
    %1345 = vmatprep.subr.mxu0 0.0
    %1346 = vmatpush1.msra.mxu0 0.0
    %1347 = vmatprep.subr.mxu0 0.0
    %1348 = vmatpush1.msra.mxu0 0.0
    %1349 = vmatprep.subr.mxu0 0.0
    %1350 = vmatpush1.msra.mxu0 0.0
    %1351 = vmatprep.subr.mxu0 0.0
    %1352 = vmatpush1.msra.mxu0 0.0
    %1353 = vmatprep.subr.mxu0 0.0
    %1354 = vmatpush1.msra.mxu0 0.0
    %1355 = vmatprep.subr.mxu0 0.0
    %1356 = vmatpush1.msra.mxu0 0.0
    %1357 = vmatprep.subr.mxu0 0.0
    %1358 = vmatpush1.msra.mxu0 0.0
    %1359 = vmatprep.subr.mxu0 0.0
    %1360 = vmatpush1.msra.mxu0 0.0
    %1361 = vmatprep.subr.mxu0 0.0
    %1362 = vmatpush1.msra.mxu0 0.0
    %1363 = vmatprep.subr.mxu0 0.0
    %1364 = vmatpush1.msra.mxu0 0.0
    %1365 = vmatprep.subr.mxu0 0.0
    %1366 = vmatpush1.msra.mxu0 0.0
    %1367 = vmatprep.subr.mxu0 0.0
    %1368 = vmatpush1.msra.mxu0 0.0
    %1369 = vmatprep.subr.mxu0 0.0
    %1370 = vmatpush1.msra.mxu0 0.0
    %1371 = vmatprep.subr.mxu0 0.0
    %1372 = vmatpush1.msra.mxu0 0.0
    %1373 = vmatprep.subr.mxu0 0.0
    %1374 = vmatpush1.msra.mxu0 0.0
    %1375 = vmatprep.mubr.f32.mxu0 0.0
    %1376 = vmatmul.mubr.f32.gmra.mrb[0].mxu0 %v1309
    %v1377 = vpop.f32.mrb[0].mxu0
    %v1378 = vadd.f32 %v1307, %v1377
    %v1379 = vpop.f32.mrb[0].mxu0
    %1380 = vdwg.mxu0
    %v1381 = vmul.f32 %v1378, %v1378
    %v1382 = vmul.f32 %v1378, %v1381
    %v1383 = vmul.f32 %v1382, 0.044715
    %v1384 = vadd.f32 %v1378, %v1383
    %v1385 = vmul.f32 %v1384, 0.7978846
    %v1386 = vtanh.pop %v1385
    %v1387 = vadd.f32 %v1386, 1.0
    %v1388 = vmul.f32 %v1387, 0.5
    %v1389 = vmul.f32 %v1378, %v1388
    %v1390 = vlaneseq
    %v1391 = vshrl.u32 %v1390, 7
    %v1392 = vsub.s32 2, %v1391
    %v1393 = vrot.slane %v58, %v1392
    %1394 = vmatprep.subr.mxu0 0.0
    %1395 = vmatpush1.msra.mxu0 %v75
    %1396 = vmatprep.subr.mxu0 0.0
    %1397 = vmatpush1.msra.mxu0 %v76
    %1398 = vmatprep.subr.mxu0 0.0
    %1399 = vmatpush1.msra.mxu0 %v77
    %1400 = vmatprep.subr.mxu0 0.0
    %1401 = vmatpush1.msra.mxu0 %v78
    %1402 = vmatprep.subr.mxu0 0.0
    %1403 = vmatpush1.msra.mxu0 %v79
    %1404 = vmatprep.subr.mxu0 0.0
    %1405 = vmatpush1.msra.mxu0 %v80
    %1406 = vmatprep.subr.mxu0 0.0
    %1407 = vmatpush1.msra.mxu0 %v81
    %1408 = vmatprep.subr.mxu0 0.0
    %1409 = vmatpush1.msra.mxu0 %v82
    %1410 = vmatprep.subr.mxu0 0.0
    %1411 = vmatpush1.msra.mxu0 %v83
    %1412 = vmatprep.subr.mxu0 0.0
    %1413 = vmatpush1.msra.mxu0 %v84
    %1414 = vmatprep.subr.mxu0 0.0
    %1415 = vmatpush1.msra.mxu0 %v85
    %1416 = vmatprep.subr.mxu0 0.0
    %1417 = vmatpush1.msra.mxu0 %v86
    %1418 = vmatprep.subr.mxu0 0.0
    %1419 = vmatpush1.msra.mxu0 %v87
    %1420 = vmatprep.subr.mxu0 0.0
    %1421 = vmatpush1.msra.mxu0 %v88
    %1422 = vmatprep.subr.mxu0 0.0
    %1423 = vmatpush1.msra.mxu0 %v89
    %1424 = vmatprep.subr.mxu0 0.0
    %1425 = vmatpush1.msra.mxu0 %v90
    %1426 = vmatprep.subr.mxu0 0.0
    %1427 = vmatpush1.msra.mxu0 0.0
    %1428 = vmatprep.subr.mxu0 0.0
    %1429 = vmatpush1.msra.mxu0 0.0
    %1430 = vmatprep.subr.mxu0 0.0
    %1431 = vmatpush1.msra.mxu0 0.0
    %1432 = vmatprep.subr.mxu0 0.0
    %1433 = vmatpush1.msra.mxu0 0.0
    %1434 = vmatprep.subr.mxu0 0.0
    %1435 = vmatpush1.msra.mxu0 0.0
    %1436 = vmatprep.subr.mxu0 0.0
    %1437 = vmatpush1.msra.mxu0 0.0
    %1438 = vmatprep.subr.mxu0 0.0
    %1439 = vmatpush1.msra.mxu0 0.0
    %1440 = vmatprep.subr.mxu0 0.0
    %1441 = vmatpush1.msra.mxu0 0.0
    %1442 = vmatprep.subr.mxu0 0.0
    %1443 = vmatpush1.msra.mxu0 0.0
    %1444 = vmatprep.subr.mxu0 0.0
    %1445 = vmatpush1.msra.mxu0 0.0
    %1446 = vmatprep.subr.mxu0 0.0
    %1447 = vmatpush1.msra.mxu0 0.0
    %1448 = vmatprep.subr.mxu0 0.0
    %1449 = vmatpush1.msra.mxu0 0.0
    %1450 = vmatprep.subr.mxu0 0.0
    %1451 = vmatpush1.msra.mxu0 0.0
    %1452 = vmatprep.subr.mxu0 0.0
    %1453 = vmatpush1.msra.mxu0 0.0
    %1454 = vmatprep.subr.mxu0 0.0
    %1455 = vmatpush1.msra.mxu0 0.0
    %1456 = vmatprep.subr.mxu0 0.0
    %1457 = vmatpush1.msra.mxu0 0.0
    %1458 = vmatprep.mubr.f32.mxu0 0.0
    %1459 = vmatmul.mubr.f32.gmra.mrb[0].mxu0 %v1389
    %v1460 = vpop.f32.mrb[0].mxu0
    %v1461 = vadd.f32 %v1393, %v1460
    %v1462 = vpop.f32.mrb[0].mxu0
    %1463 = vdwg.mxu0
    %v1464 = vmul.f32 %v1303, 2.0
    %v1465 = vadd.f32 %v1464, %v1461
    %v1466 = vlaneseq
    %v1467 = vshrl.u32 %v1466, 7
    %v1468 = vsub.s32 3, %v1467
    %v1469 = vrot.slane %v58, %v1468
    %v1471 = vsel %vm99, %v1465, 0
    %1473 = vmatprep.subr.mxu0 0.0
    %1474 = vmatpush1.msra.mxu0 %v91
    %1475 = vmatprep.subr.mxu0 0.0
    %1476 = vmatpush1.msra.mxu0 %v92
    %1477 = vmatprep.subr.mxu0 0.0
    %1478 = vmatpush1.msra.mxu0 %v93
    %1479 = vmatprep.subr.mxu0 0.0
    %1480 = vmatpush1.msra.mxu0 %v94
    %1481 = vmatprep.subr.mxu0 0.0
    %1482 = vmatpush1.msra.mxu0 0.0
    %1483 = vmatprep.subr.mxu0 0.0
    %1484 = vmatpush1.msra.mxu0 0.0
    %1485 = vmatprep.subr.mxu0 0.0
    %1486 = vmatpush1.msra.mxu0 0.0
    %1487 = vmatprep.subr.mxu0 0.0
    %1488 = vmatpush1.msra.mxu0 0.0
    %1489 = vmatprep.subr.mxu0 0.0
    %1490 = vmatpush1.msra.mxu0 0.0
    %1491 = vmatprep.subr.mxu0 0.0
    %1492 = vmatpush1.msra.mxu0 0.0
    %1493 = vmatprep.subr.mxu0 0.0
    %1494 = vmatpush1.msra.mxu0 0.0
    %1495 = vmatprep.subr.mxu0 0.0
    %1496 = vmatpush1.msra.mxu0 0.0
    %1497 = vmatprep.subr.mxu0 0.0
    %1498 = vmatpush1.msra.mxu0 0.0
    %1499 = vmatprep.subr.mxu0 0.0
    %1500 = vmatpush1.msra.mxu0 0.0
    %1501 = vmatprep.subr.mxu0 0.0
    %1502 = vmatpush1.msra.mxu0 0.0
    %1503 = vmatprep.subr.mxu0 0.0
    %1504 = vmatpush1.msra.mxu0 0.0
    %1505 = vmatprep.subr.mxu0 0.0
    %1506 = vmatpush1.msra.mxu0 0.0
    %1507 = vmatprep.subr.mxu0 0.0
    %1508 = vmatpush1.msra.mxu0 0.0
    %1509 = vmatprep.subr.mxu0 0.0
    %1510 = vmatpush1.msra.mxu0 0.0
    %1511 = vmatprep.subr.mxu0 0.0
    %1512 = vmatpush1.msra.mxu0 0.0
    %1513 = vmatprep.subr.mxu0 0.0
    %1514 = vmatpush1.msra.mxu0 0.0
    %1515 = vmatprep.subr.mxu0 0.0
    %1516 = vmatpush1.msra.mxu0 0.0
    %1517 = vmatprep.subr.mxu0 0.0
    %1518 = vmatpush1.msra.mxu0 0.0
    %1519 = vmatprep.subr.mxu0 0.0
    %1520 = vmatpush1.msra.mxu0 0.0
    %1521 = vmatprep.subr.mxu0 0.0
    %1522 = vmatpush1.msra.mxu0 0.0
    %1523 = vmatprep.subr.mxu0 0.0
    %1524 = vmatpush1.msra.mxu0 0.0
    %1525 = vmatprep.subr.mxu0 0.0
    %1526 = vmatpush1.msra.mxu0 0.0
    %1527 = vmatprep.subr.mxu0 0.0
    %1528 = vmatpush1.msra.mxu0 0.0
    %1529 = vmatprep.subr.mxu0 0.0
    %1530 = vmatpush1.msra.mxu0 0.0
    %1531 = vmatprep.subr.mxu0 0.0
    %1532 = vmatpush1.msra.mxu0 0.0
    %1533 = vmatprep.subr.mxu0 0.0
    %1534 = vmatpush1.msra.mxu0 0.0
    %1535 = vmatprep.subr.mxu0 0.0
    %1536 = vmatpush1.msra.mxu0 0.0
    %1537 = vmatprep.mubr.f32.mxu0 0.0
    %1538 = vmatmul.mubr.f32.gmra.mrb[0].mxu0 %v1471
    %v1539 = vpop.f32.mrb[0].mxu0
    %v1540 = vadd.f32 %v1469, %v1539
    %v1541 = vpop.f32.mrb[0].mxu0
    %1542 = vdwg.mxu0
    %v1543 = vsel %vm99, %v1540, 0.0
    %v1544 = vrot.slane %v1543, 4
    %v1545 = vadd.f32 %v1543, %v1544
    %v1546 = vrot.slane %v1545, 2
    %v1547 = vadd.f32 %v1545, %v1546
    %v1548 = vrot.slane %v1547, 1
    %v1549 = vadd.f32 %v1547, %v1548
    %v1550 = vmul.f32 %v1549, %v180
    %v1551 = vsub.f32 %v1540, %v1550
    %v1552 = vmul.f32 %v1551, %v1551
    %v1553 = vsel %vm99, %v1552, 0.0
    %v1554 = vrot.slane %v1553, 4
    %v1555 = vadd.f32 %v1553, %v1554
    %v1556 = vrot.slane %v1555, 2
    %v1557 = vadd.f32 %v1555, %v1556
    %v1558 = vrot.slane %v1557, 1
    %v1559 = vadd.f32 %v1557, %v1558
    %v1560 = vmul.f32 %v1559, %v180
    %v1561 = vlaneseq
    %v1562 = vshrl.u32 %v1561, 7
    %v1563 = vsub.s32 4, %v1562
    %v1564 = vrot.slane %v58, %v1563
    %v1565 = vmul.f32 %v1564, %v1551
    %v1566 = vadd.f32 %v1560, 1e-05
    %v1567 = vrsqrt.pop %v1566
    %v1568 = vmul.f32 %v1565, %v1567
    %v1569 = vlaneseq
    %v1570 = vshrl.u32 %v1569, 7
    %v1571 = vsub.s32 5, %v1570
    %v1572 = vrot.slane %v58, %v1571
    %v1573 = vadd.f32 %v1568, %v1572
    %v1574 = vadd.f32 %v1573, %v56
    %1575 = vst.msk [vmem:[#allocation7] sm:$0xff] %vm99, %v1574
    // Predicated region
    $region42: #{identity_mapping_forward.1} parent=1 // pred_check
      _
    $region43: #{identity_mapping_forward.1} parent=1 // pred_check_branch
      %1577 = sbr.rel (0) target = $region45
    $region44: #{identity_mapping_forward.1} parent=1 // pred_region
      %s1579 = ssub.s32 128, 128
      %1580 = vsyncadd [#allocation4], %s1579
      %s1582 = sshll.u32 [#allocation7], 4
      %s1583 = int_to_ptr.vmem [resolvable:$true] %s1582
      %1585 = dma.vmem_to_hbm [thread:$0]  %s1583, 128, %s8, [#allocation4]
    $region45: #{identity_mapping_forward.1} parent=1 // pred_fallthru
      _
    // Predicated region
    $region46: #{identity_mapping_forward.1} parent=1 // pred_check
      _
    $region47: #{identity_mapping_forward.1} parent=1 // pred_check_branch
      %1587 = sbr.rel (0) target = $region49
    $region48: #{identity_mapping_forward.1} parent=1 // pred_region
      %1588 = dma.done [#allocation4], 128
    $region49: #{identity_mapping_forward.1} parent=1 // pred_fallthru
      _
    %1589 = vsyncpa [#allocation3], 1
    %1590 = vsyncpa [#allocation6], 1
    %1591 = vsyncpa [#allocation4], 1

</llo_original>
